<compile_context>
chip_gen: v7x
topology: tpu7x:2x2x1
jax: 0.10.0
libtpu: 0.0.40
codegen_flags: <defaults>
</compile_context>

<pallas_src>
import functools

import jax
import jax.numpy as jnp
from jax.experimental import pallas as pl
from jax.experimental.pallas import tpu as pltpu

_LN_EPS = 1e-6  # UER/TencentPretrain LayerNorm default


def _pick_tile(dim, target, unit):
    """Largest tile <= target that divides `dim` and is a multiple of `unit`."""
    if dim <= target:
        return dim
    t = (target // unit) * unit
    while t >= unit:
        if dim % t == 0:
            return t
        t -= unit
    return dim  # fallback: whole dim (only at odd shapes)


def _layernorm_f32(x, gamma, beta, eps):
    x = x.astype(jnp.float32)
    mu = jnp.mean(x, axis=-1, keepdims=True)
    xc = x - mu
    var = jnp.mean(xc * xc, axis=-1, keepdims=True)
    y = xc * jax.lax.rsqrt(var + eps)
    return y * gamma.astype(jnp.float32) + beta.astype(jnp.float32)


# ----------------------------- Pallas kernels ------------------------------


def _embed_add_kernel(a_ref, b_ref, o_ref):
    o_ref[...] = (a_ref[...] + b_ref[...]).astype(o_ref.dtype)


def _ln_linear_kernel(x_ref, g_ref, b_ref, w_ref, bias_ref, o_ref, h_ref, *, eps):
    # grid = (M tiles, N tiles); LayerNorm computed once per M tile (j == 0) into VMEM.
    @pl.when(pl.program_id(1) == 0)
    def _():
        h_ref[...] = _layernorm_f32(x_ref[...], g_ref[...], b_ref[...], eps).astype(h_ref.dtype)

    y = jnp.dot(h_ref[...], w_ref[...], preferred_element_type=jnp.float32)
    y = y + bias_ref[...].astype(jnp.float32)
    o_ref[...] = y.astype(o_ref.dtype)


def _linear_res_kernel(x_ref, w_ref, bias_ref, res_ref, o_ref):
    # y = x @ w + b + residual   (residual add fused into matmul epilogue)
    y = jnp.dot(x_ref[...], w_ref[...], preferred_element_type=jnp.float32)
    y = y + bias_ref[...].astype(jnp.float32) + res_ref[...].astype(jnp.float32)
    o_ref[...] = y.astype(o_ref.dtype)


def _ffn_kernel(x_ref, g_ref, b_ref, w1_ref, b1_ref, w2_ref, b2_ref,
                o_ref, h_ref, acc_ref, *, eps):
    # Fused pre-LN FFN: out = x + GELU(LN(x) @ W1 + b1) @ W2 + b2
    # grid = (M tiles, FF tiles); the [tm, FF] intermediate lives one tf-slab at a time.
    f = pl.program_id(1)

    @pl.when(f == 0)
    def _():
        h_ref[...] = _layernorm_f32(x_ref[...], g_ref[...], b_ref[...], eps).astype(h_ref.dtype)
        acc_ref[...] = jnp.zeros_like(acc_ref)

    t = jnp.dot(h_ref[...], w1_ref[...], preferred_element_type=jnp.float32)
    t = t + b1_ref[...].astype(jnp.float32)
    # TODO(synk): reference uses exact erf-GELU; tanh approximation used here
    # (Mosaic-friendly transcendental path on the EUP).
    t = 0.5 * t * (1.0 + jnp.tanh(0.7978845608028654 * (t + 0.044715 * t * t * t)))
    acc_ref[...] += jnp.dot(t.astype(w2_ref.dtype), w2_ref[...],
                            preferred_element_type=jnp.float32)

    @pl.when(f == pl.num_programs(1) - 1)
    def _():
        out = acc_ref[...] + b2_ref[...].astype(jnp.float32) + x_ref[...].astype(jnp.float32)
        o_ref[...] = out.astype(o_ref.dtype)


def _attention_kernel(q_ref, k_ref, v_ref, seg_ref, o_ref, *, scale):
    # One batch element per grid step. q/k/v refs: [1, NH, S, DH]; seg ref: [1, 1, S].
    # Fold the softmax scale into q (NH*S*DH elems) rather than the scores (NH*S*S).
    q = (q_ref[0].astype(jnp.float32) * scale).astype(q_ref.dtype)   # [NH, S, DH] bf16
    k = k_ref[0]
    v = v_ref[0]
    nh, s_len, _ = q.shape

    # scores in f32 (bf16 MXU inputs, f32 accumulate)
    s = jnp.einsum('hqd,hkd->hqk', q, k, preferred_element_type=jnp.float32)

    # causal + key-padding mask, generated in-kernel (no [B,S,S] bias streamed from HBM)
    rows = jax.lax.broadcasted_iota(jnp.int32, (s_len, s_len), 0)
    cols = jax.lax.broadcasted_iota(jnp.int32, (s_len, s_len), 1)
    key_valid = seg_ref[0] > 0                          # [1, S]
    valid = (cols <= rows) & key_valid                  # [S, S]
    s = jnp.where(valid[None, :, :], s, -1e9)

    m = jnp.max(s, axis=-1, keepdims=True)
    p = jnp.exp(s - m)
    denom = jnp.sum(p, axis=-1, keepdims=True)
    p = p * pl.reciprocal(denom, approx=True)

    ctx = jnp.einsum('hqk,hkd->hqd', p.astype(v.dtype), v,
                     preferred_element_type=jnp.float32)
    o_ref[0] = ctx.astype(o_ref.dtype)


# ----------------------------- kernel wrappers ------------------------------


def pallas_embed_add(tok, pos, out_dtype=jnp.bfloat16, tile_m=1024):
    M, H = tok.shape
    tm = _pick_tile(M, tile_m, 8)
    return pl.pallas_call(
        _embed_add_kernel,
        out_shape=jax.ShapeDtypeStruct((M, H), out_dtype),
        grid_spec=pltpu.PrefetchScalarGridSpec(
            num_scalar_prefetch=0,
            grid=(M // tm,),
            in_specs=[pl.BlockSpec((tm, H), lambda i: (i, 0)),
                      pl.BlockSpec((tm, H), lambda i: (i, 0))],
            out_specs=pl.BlockSpec((tm, H), lambda i: (i, 0)),
        ),
        compiler_params=pltpu.CompilerParams(dimension_semantics=("parallel",)),
    )(tok, pos)


def pallas_ln_linear(x, gamma, beta, w, bias, out_dtype=jnp.bfloat16,
                     eps=_LN_EPS, tile_m=256, tile_n=512):
    """out = LN(x) @ w + bias, LayerNorm fused into the matmul prologue."""
    M, K = x.shape
    _, N = w.shape
    tm = _pick_tile(M, tile_m, 8)
    tn = _pick_tile(N, tile_n, 128)
    return pl.pallas_call(
        functools.partial(_ln_linear_kernel, eps=eps),
        out_shape=jax.ShapeDtypeStruct((M, N), out_dtype),
        grid_spec=pltpu.PrefetchScalarGridSpec(
            num_scalar_prefetch=0,
            grid=(M // tm, N // tn),
            in_specs=[
                pl.BlockSpec((tm, K), lambda i, j: (i, 0)),
                pl.BlockSpec((1, K), lambda i, j: (0, 0)),
                pl.BlockSpec((1, K), lambda i, j: (0, 0)),
                pl.BlockSpec((K, tn), lambda i, j: (0, j)),
                pl.BlockSpec((1, tn), lambda i, j: (0, j)),
            ],
            out_specs=pl.BlockSpec((tm, tn), lambda i, j: (i, j)),
            scratch_shapes=[pltpu.VMEM((tm, K), jnp.bfloat16)],
        ),
        compiler_params=pltpu.CompilerParams(
            dimension_semantics=("parallel", "arbitrary")),
    )(x, gamma, beta, w, bias)


def pallas_linear_residual(x, w, bias, res, out_dtype=jnp.bfloat16,
                           tile_m=256, tile_n=512):
    """out = x @ w + bias + res (residual add fused into the epilogue)."""
    M, K = x.shape
    _, N = w.shape
    tm = _pick_tile(M, tile_m, 8)
    tn = _pick_tile(N, tile_n, 128)
    return pl.pallas_call(
        _linear_res_kernel,
        out_shape=jax.ShapeDtypeStruct((M, N), out_dtype),
        grid_spec=pltpu.PrefetchScalarGridSpec(
            num_scalar_prefetch=0,
            grid=(M // tm, N // tn),
            in_specs=[
                pl.BlockSpec((tm, K), lambda i, j: (i, 0)),
                pl.BlockSpec((K, tn), lambda i, j: (0, j)),
                pl.BlockSpec((1, tn), lambda i, j: (0, j)),
                pl.BlockSpec((tm, tn), lambda i, j: (i, j)),
            ],
            out_specs=pl.BlockSpec((tm, tn), lambda i, j: (i, j)),
        ),
        compiler_params=pltpu.CompilerParams(
            dimension_semantics=("parallel", "parallel")),
    )(x, w, bias, res)


def pallas_ffn(x, gamma, beta, w1, b1, w2, b2, out_dtype=jnp.bfloat16,
               eps=_LN_EPS, tile_m=256, tile_f=512):
    """Fused pre-LN FFN block with residual; FF dim streamed in K-tiles."""
    M, H = x.shape
    _, FF = w1.shape
    tm = _pick_tile(M, tile_m, 8)
    tf = _pick_tile(FF, tile_f, 128)
    return pl.pallas_call(
        functools.partial(_ffn_kernel, eps=eps),
        out_shape=jax.ShapeDtypeStruct((M, H), out_dtype),
        grid_spec=pltpu.PrefetchScalarGridSpec(
            num_scalar_prefetch=0,
            grid=(M // tm, FF // tf),
            in_specs=[
                pl.BlockSpec((tm, H), lambda i, f: (i, 0)),
                pl.BlockSpec((1, H), lambda i, f: (0, 0)),
                pl.BlockSpec((1, H), lambda i, f: (0, 0)),
                pl.BlockSpec((H, tf), lambda i, f: (0, f)),
                pl.BlockSpec((1, tf), lambda i, f: (0, f)),
                pl.BlockSpec((tf, H), lambda i, f: (f, 0)),
                pl.BlockSpec((1, H), lambda i, f: (0, 0)),
            ],
            out_specs=pl.BlockSpec((tm, H), lambda i, f: (i, 0)),
            scratch_shapes=[pltpu.VMEM((tm, H), jnp.bfloat16),
                            pltpu.VMEM((tm, H), jnp.float32)],
        ),
        compiler_params=pltpu.CompilerParams(
            dimension_semantics=("parallel", "arbitrary")),
    )(x, gamma, beta, w1, b1, w2, b2)


def pallas_attention(q, k, v, seg_b, *, scale):
    """q/k/v: [B, NH, S, DH] bf16; seg_b: [B, 1, S] int32. Returns [B, NH, S, DH] bf16."""
    B, NH, S, DH = q.shape
    # TODO(synk): for long sequences, switch to a flash-style (B, S//tq, S//tk) grid with
    # online softmax to bound per-step VMEM on v7x; full-S blocks are fine at these shapes.
    return pl.pallas_call(
        functools.partial(_attention_kernel, scale=scale),
        out_shape=jax.ShapeDtypeStruct((B, NH, S, DH), q.dtype),
        grid_spec=pltpu.PrefetchScalarGridSpec(
            num_scalar_prefetch=0,
            grid=(B,),
            in_specs=[
                pl.BlockSpec((1, NH, S, DH), lambda b: (b, 0, 0, 0)),
                pl.BlockSpec((1, NH, S, DH), lambda b: (b, 0, 0, 0)),
                pl.BlockSpec((1, NH, S, DH), lambda b: (b, 0, 0, 0)),
                pl.BlockSpec((1, 1, S), lambda b: (b, 0, 0)),
            ],
            out_specs=pl.BlockSpec((1, NH, S, DH), lambda b: (b, 0, 0, 0)),
        ),
        compiler_params=pltpu.CompilerParams(dimension_semantics=("parallel",)),
    )(q, k, v, seg_b)


# ----------------------------- model ------------------------------


def init_params(key, vocab, hidden, max_seq, n_layers, ffn):
    n_keys = 4 + n_layers * 4
    keys = iter(jax.random.split(key, n_keys))

    def nrm(shape, dtype=jnp.bfloat16, scale=0.02):
        return (scale * jax.random.normal(next(keys), shape, jnp.float32)).astype(dtype)

    params = {
        "word_emb": nrm((vocab, hidden), jnp.float32),
        "pos_emb": nrm((max_seq, hidden), jnp.float32),
        "lnf_g": jnp.ones((1, hidden), jnp.float32),
        "lnf_b": jnp.zeros((1, hidden), jnp.float32),
        "w_lm": nrm((hidden, vocab)),                       # bf16
        "b_lm": jnp.zeros((1, vocab), jnp.float32),
        "layers": [],
    }
    for _ in range(n_layers):
        params["layers"].append({
            "ln1_g": jnp.ones((1, hidden), jnp.float32),
            "ln1_b": jnp.zeros((1, hidden), jnp.float32),
            "wqkv": nrm((hidden, 3 * hidden)),              # bf16
            "bqkv": jnp.zeros((1, 3 * hidden), jnp.float32),
            "wo": nrm((hidden, hidden)),                    # bf16
            "bo": jnp.zeros((1, hidden), jnp.float32),
            "ln2_g": jnp.ones((1, hidden), jnp.float32),
            "ln2_b": jnp.zeros((1, hidden), jnp.float32),
            "w1": nrm((hidden, ffn)),                       # bf16
            "b1": jnp.zeros((1, ffn), jnp.float32),
            "w2": nrm((ffn, hidden)),                       # bf16
            "b2": jnp.zeros((1, hidden), jnp.float32),
        })
    return params


def generate_lm_forward(params, src, seg, *, n_heads):
    """src, seg: int32 [B, S].  Returns logits f32 [B, S, vocab]."""
    B, S = src.shape
    H = params["word_emb"].shape[1]
    V = params["w_lm"].shape[1]
    dh = H // n_heads
    scale = 1.0 / (dh ** 0.5)

    # --- embedding (gathers are glue; the add runs in a Pallas kernel, output bf16) ---
    tok = params["word_emb"][src.reshape(-1)]                       # [B*S, H] f32
    pos = params["pos_emb"][jnp.tile(jnp.arange(S), (B,))]          # [B*S, H] f32
    x = pallas_embed_add(tok, pos)                                  # [B*S, H] bf16

    # key-padding info for the in-kernel mask (tiny [B,1,S] int32; no [B,S,S] bias in HBM)
    seg_b = seg.reshape(B, 1, S).astype(jnp.int32)

    def to_heads(t):
        return t.reshape(B, S, n_heads, dh).transpose(0, 2, 1, 3)   # [B, NH, S, DH]

    # --- pre-LN transformer blocks ---
    for layer in params["layers"]:
        # LN1 fused into the QKV projection
        qkv = pallas_ln_linear(x, layer["ln1_g"], layer["ln1_b"],
                               layer["wqkv"], layer["bqkv"])        # [B*S, 3H] bf16
        q, k, v = jnp.split(qkv, 3, axis=-1)
        ctx = pallas_attention(to_heads(q), to_heads(k), to_heads(v),
                               seg_b, scale=scale)                  # [B, NH, S, DH]
        ctx = ctx.transpose(0, 2, 1, 3).reshape(B * S, H)
        # attention output projection with fused residual add
        x = pallas_linear_residual(ctx, layer["wo"], layer["bo"], x)
        # fused LN2 + FFN1 + GELU + FFN2 + residual
        x = pallas_ffn(x, layer["ln2_g"], layer["ln2_b"],
                       layer["w1"], layer["b1"], layer["w2"], layer["b2"])

    # --- final LayerNorm fused into the LM output layer ---
    logits = pallas_ln_linear(x, params["lnf_g"], params["lnf_b"],
                              params["w_lm"], params["b_lm"],
                              out_dtype=jnp.float32)                # [B*S, V] f32
    return logits.reshape(B, S, V)


if __name__ == "__main__":
    B, S, H, V, L, NH, FF = 2, 8, 128, 256, 2, 2, 512

    params = init_params(jax.random.PRNGKey(0), vocab=V, hidden=H,
                         max_seq=S, n_layers=L, ffn=FF)

    k_src, _ = jax.random.split(jax.random.PRNGKey(0))
    src = jax.random.randint(k_src, (B, S), 0, V, dtype=jnp.int32)
    seg = jnp.ones((B, S), jnp.int32).at[1, -2:].set(0)   # last 2 tokens of batch 1 padded

    fwd = jax.jit(functools.partial(generate_lm_forward, n_heads=NH))
    logits = fwd(params, src, seg)
    jax.block_until_ready(logits)

    assert logits.shape == (B, S, V)
    assert bool(jnp.all(jnp.isfinite(logits)))
    print("KERNEL_OK")
</pallas_src>

<mosaic_0001>
module attributes {stable_mosaic.version = 11 : i64} {
  func.func @_embed_add_kernel(%arg0: i32, %arg1: memref<16x128xf32, #tpu.memory_space<vmem>>, %arg2: memref<16x128xf32, #tpu.memory_space<vmem>>, %arg3: memref<16x128xbf16, #tpu.memory_space<vmem>>) attributes {dimension_semantics = [#tpu.dimension_semantics<parallel>], iteration_bounds = array<i64: 1>, scalar_prefetch = 0 : i64, scratch_operands = 0 : i64, tpu.core_type = #tpu.core_type<tc>, window_params = [{transform_indices = @transform_0, window_bounds = array<i64: 16, 128>}, {transform_indices = @transform_1, window_bounds = array<i64: 16, 128>}, {transform_indices = @transform_2, window_bounds = array<i64: 16, 128>}]} {
    %c0 = arith.constant 0 : index
    %c0_0 = arith.constant 0 : index
    %0 = vector.load %arg1[%c0, %c0_0] : memref<16x128xf32, #tpu.memory_space<vmem>>, vector<16x128xf32>
    %c0_1 = arith.constant 0 : index
    %c0_2 = arith.constant 0 : index
    %1 = vector.load %arg2[%c0_1, %c0_2] : memref<16x128xf32, #tpu.memory_space<vmem>>, vector<16x128xf32>
    %2 = arith.addf %0, %1 : vector<16x128xf32>
    %3 = arith.truncf %2 : vector<16x128xf32> to vector<16x128xbf16>
    %c0_3 = arith.constant 0 : index
    %c0_4 = arith.constant 0 : index
    %4 = vector.load %arg3[%c0_3, %c0_4] : memref<16x128xbf16, #tpu.memory_space<vmem>>, vector<16x128xbf16>
    tpu.vector_store %arg3[%c0_3, %c0_4], %3 {strides = array<i32>} : memref<16x128xbf16, #tpu.memory_space<vmem>>, vector<16x128xbf16>,
    return
  }
  func.func @transform_0(%arg0: i32) -> (i32, i32) {
    %c0_i32 = arith.constant 0 : i32
    %c0_i32_0 = arith.constant 0 : i32
    return %arg0, %c0_i32 : i32, i32
  }
  func.func @transform_1(%arg0: i32) -> (i32, i32) {
    %c0_i32 = arith.constant 0 : i32
    %c0_i32_0 = arith.constant 0 : i32
    return %arg0, %c0_i32 : i32, i32
  }
  func.func @transform_2(%arg0: i32) -> (i32, i32) {
    %c0_i32 = arith.constant 0 : i32
    %c0_i32_0 = arith.constant 0 : i32
    return %arg0, %c0_i32 : i32, i32
  }
}

module attributes {stable_mosaic.version = 11 : i64} {
  func.func @_ln_linear_kernel(%arg0: i32, %arg1: i32, %arg2: memref<16x128xbf16, #tpu.memory_space<vmem>>, %arg3: memref<1x128xf32, #tpu.memory_space<vmem>>, %arg4: memref<1x128xf32, #tpu.memory_space<vmem>>, %arg5: memref<128x384xbf16, #tpu.memory_space<vmem>>, %arg6: memref<1x384xf32, #tpu.memory_space<vmem>>, %arg7: memref<16x384xbf16, #tpu.memory_space<vmem>>, %arg8: memref<16x128xbf16, #tpu.memory_space<vmem>>) attributes {dimension_semantics = [#tpu.dimension_semantics<parallel>, #tpu.dimension_semantics<arbitrary>], iteration_bounds = array<i64: 1, 1>, scalar_prefetch = 0 : i64, scratch_operands = 1 : i64, tpu.core_type = #tpu.core_type<tc>, window_params = [{transform_indices = @transform_0, window_bounds = array<i64: 16, 128>}, {pipeline_mode = #tpu.pipeline_mode<synchronous>, transform_indices = @transform_1, window_bounds = array<i64: 1, 128>}, {pipeline_mode = #tpu.pipeline_mode<synchronous>, transform_indices = @transform_2, window_bounds = array<i64: 1, 128>}, {transform_indices = @transform_3, window_bounds = array<i64: 128, 384>}, {transform_indices = @transform_4, window_bounds = array<i64: 1, 384>}, {transform_indices = @transform_5, window_bounds = array<i64: 16, 384>}]} {
    %c0_i32 = arith.constant 0 : i32
    %0 = arith.cmpi eq, %arg1, %c0_i32 : i32
    %1 = arith.extui %0 : i1 to i32
    %c0_i32_0 = arith.constant 0 : i32
    %2 = arith.cmpi ne, %1, %c0_i32_0 : i32
    scf.if %2 {
      %c0_8 = arith.constant 0 : index
      %c0_9 = arith.constant 0 : index
      %11 = vector.load %arg2[%c0_8, %c0_9] : memref<16x128xbf16, #tpu.memory_space<vmem>>, vector<16x128xbf16>
      %c0_10 = arith.constant 0 : index
      %c0_11 = arith.constant 0 : index
      %12 = vector.load %arg3[%c0_10, %c0_11] : memref<1x128xf32, #tpu.memory_space<vmem>>, vector<1x128xf32>
      %c0_12 = arith.constant 0 : index
      %c0_13 = arith.constant 0 : index
      %13 = vector.load %arg4[%c0_12, %c0_13] : memref<1x128xf32, #tpu.memory_space<vmem>>, vector<1x128xf32>
      %14 = arith.extf %11 : vector<16x128xbf16> to vector<16x128xf32>
      %cst_14 = arith.constant dense<0.000000e+00> : vector<16xf32>
      %15 = vector.multi_reduction <add>, %14, %cst_14 [1] : vector<16x128xf32> to vector<16xf32>
      %16 = vector.shape_cast %15 : vector<16xf32> to vector<16x1xf32>
      %cst_15 = arith.constant 1.280000e+02 : f32
      %17 = vector.broadcast %cst_15 : f32 to vector<16x1xf32>
      %18 = arith.divf %16, %17 : vector<16x1xf32>
      %19 = vector.broadcast %18 : vector<16x1xf32> to vector<16x128xf32>
      %20 = arith.subf %14, %19 : vector<16x128xf32>
      %21 = arith.mulf %20, %20 : vector<16x128xf32>
      %cst_16 = arith.constant dense<0.000000e+00> : vector<16xf32>
      %22 = vector.multi_reduction <add>, %21, %cst_16 [1] : vector<16x128xf32> to vector<16xf32>
      %23 = vector.shape_cast %22 : vector<16xf32> to vector<16x1xf32>
      %cst_17 = arith.constant 1.280000e+02 : f32
      %24 = vector.broadcast %cst_17 : f32 to vector<16x1xf32>
      %25 = arith.divf %23, %24 : vector<16x1xf32>
      %cst_18 = arith.constant 9.99999997E-7 : f32
      %26 = vector.broadcast %cst_18 : f32 to vector<16x1xf32>
      %27 = arith.addf %25, %26 : vector<16x1xf32>
      %28 = math.rsqrt %27 : vector<16x1xf32>
      %29 = vector.broadcast %28 : vector<16x1xf32> to vector<16x128xf32>
      %30 = arith.mulf %20, %29 : vector<16x128xf32>
      %31 = vector.broadcast %12 : vector<1x128xf32> to vector<16x128xf32>
      %32 = arith.mulf %30, %31 : vector<16x128xf32>
      %33 = vector.broadcast %13 : vector<1x128xf32> to vector<16x128xf32>
      %34 = arith.addf %32, %33 : vector<16x128xf32>
      %35 = arith.truncf %34 : vector<16x128xf32> to vector<16x128xbf16>
      %c0_19 = arith.constant 0 : index
      %c0_20 = arith.constant 0 : index
      %36 = vector.load %arg8[%c0_19, %c0_20] : memref<16x128xbf16, #tpu.memory_space<vmem>>, vector<16x128xbf16>
      tpu.vector_store %arg8[%c0_19, %c0_20], %35 {strides = array<i32>} : memref<16x128xbf16, #tpu.memory_space<vmem>>, vector<16x128xbf16>,
    } else {
    }
    %c0 = arith.constant 0 : index
    %c0_1 = arith.constant 0 : index
    %3 = vector.load %arg8[%c0, %c0_1] : memref<16x128xbf16, #tpu.memory_space<vmem>>, vector<16x128xbf16>
    %c0_2 = arith.constant 0 : index
    %c0_3 = arith.constant 0 : index
    %4 = vector.load %arg5[%c0_2, %c0_3] : memref<128x384xbf16, #tpu.memory_space<vmem>>, vector<128x384xbf16>
    %cst = arith.constant dense<0.000000e+00> : vector<16x384xf32>
    %5 = tpu.matmul %3, %4, %cst {dimension_numbers = #tpu.dot_dimension_numbers<[1], [0], [0], [1], [0, 0, 1, 1], [], []>} : vector<16x128xbf16>, vector<128x384xbf16>, vector<16x384xf32> -> vector<16x384xf32>
    %c0_4 = arith.constant 0 : index
    %c0_5 = arith.constant 0 : index
    %6 = vector.load %arg6[%c0_4, %c0_5] : memref<1x384xf32, #tpu.memory_space<vmem>>, vector<1x384xf32>
    %7 = vector.broadcast %6 : vector<1x384xf32> to vector<16x384xf32>
    %8 = arith.addf %5, %7 : vector<16x384xf32>
    %9 = arith.truncf %8 : vector<16x384xf32> to vector<16x384xbf16>
    %c0_6 = arith.constant 0 : index
    %c0_7 = arith.constant 0 : index
    %10 = vector.load %arg7[%c0_6, %c0_7] : memref<16x384xbf16, #tpu.memory_space<vmem>>, vector<16x384xbf16>
    tpu.vector_store %arg7[%c0_6, %c0_7], %9 {strides = array<i32>} : memref<16x384xbf16, #tpu.memory_space<vmem>>, vector<16x384xbf16>,
    return
  }
  func.func @transform_0(%arg0: i32, %arg1: i32) -> (i32, i32) {
    %c0_i32 = arith.constant 0 : i32
    %c0_i32_0 = arith.constant 0 : i32
    return %arg0, %c0_i32 : i32, i32
  }
  func.func @transform_1(%arg0: i32, %arg1: i32) -> (i32, i32) {
    %c0_i32 = arith.constant 0 : i32
    %c0_i32_0 = arith.constant 0 : i32
    %c0_i32_1 = arith.constant 0 : i32
    return %c0_i32, %c0_i32_0 : i32, i32
  }
  func.func @transform_2(%arg0: i32, %arg1: i32) -> (i32, i32) {
    %c0_i32 = arith.constant 0 : i32
    %c0_i32_0 = arith.constant 0 : i32
    %c0_i32_1 = arith.constant 0 : i32
    return %c0_i32, %c0_i32_0 : i32, i32
  }
  func.func @transform_3(%arg0: i32, %arg1: i32) -> (i32, i32) {
    %c0_i32 = arith.constant 0 : i32
    %c0_i32_0 = arith.constant 0 : i32
    return %c0_i32, %arg1 : i32, i32
  }
  func.func @transform_4(%arg0: i32, %arg1: i32) -> (i32, i32) {
    %c0_i32 = arith.constant 0 : i32
    %c0_i32_0 = arith.constant 0 : i32
    return %c0_i32, %arg1 : i32, i32
  }
  func.func @transform_5(%arg0: i32, %arg1: i32) -> (i32, i32) {
    %c0_i32 = arith.constant 0 : i32
    return %arg0, %arg1 : i32, i32
  }
}

module attributes {stable_mosaic.version = 11 : i64} {
  func.func @_linear_res_kernel(%arg0: i32, %arg1: i32, %arg2: memref<16x128xbf16, #tpu.memory_space<vmem>>, %arg3: memref<128x128xbf16, #tpu.memory_space<vmem>>, %arg4: memref<1x128xf32, #tpu.memory_space<vmem>>, %arg5: memref<16x128xbf16, #tpu.memory_space<vmem>>, %arg6: memref<16x128xbf16, #tpu.memory_space<vmem>>) attributes {dimension_semantics = [#tpu.dimension_semantics<parallel>, #tpu.dimension_semantics<parallel>], iteration_bounds = array<i64: 1, 1>, scalar_prefetch = 0 : i64, scratch_operands = 0 : i64, tpu.core_type = #tpu.core_type<tc>, window_params = [{transform_indices = @transform_0, window_bounds = array<i64: 16, 128>}, {transform_indices = @transform_1, window_bounds = array<i64: 128, 128>}, {transform_indices = @transform_2, window_bounds = array<i64: 1, 128>}, {transform_indices = @transform_3, window_bounds = array<i64: 16, 128>}, {transform_indices = @transform_4, window_bounds = array<i64: 16, 128>}]} {
    %c0 = arith.constant 0 : index
    %c0_0 = arith.constant 0 : index
    %0 = vector.load %arg2[%c0, %c0_0] : memref<16x128xbf16, #tpu.memory_space<vmem>>, vector<16x128xbf16>
    %c0_1 = arith.constant 0 : index
    %c0_2 = arith.constant 0 : index
    %1 = vector.load %arg3[%c0_1, %c0_2] : memref<128x128xbf16, #tpu.memory_space<vmem>>, vector<128x128xbf16>
    %cst = arith.constant dense<0.000000e+00> : vector<16x128xf32>
    %2 = tpu.matmul %0, %1, %cst {dimension_numbers = #tpu.dot_dimension_numbers<[1], [0], [0], [1], [0, 0, 1, 1], [], []>} : vector<16x128xbf16>, vector<128x128xbf16>, vector<16x128xf32> -> vector<16x128xf32>
    %c0_3 = arith.constant 0 : index
    %c0_4 = arith.constant 0 : index
    %3 = vector.load %arg4[%c0_3, %c0_4] : memref<1x128xf32, #tpu.memory_space<vmem>>, vector<1x128xf32>
    %4 = vector.broadcast %3 : vector<1x128xf32> to vector<16x128xf32>
    %5 = arith.addf %2, %4 : vector<16x128xf32>
    %c0_5 = arith.constant 0 : index
    %c0_6 = arith.constant 0 : index
    %6 = vector.load %arg5[%c0_5, %c0_6] : memref<16x128xbf16, #tpu.memory_space<vmem>>, vector<16x128xbf16>
    %7 = arith.extf %6 : vector<16x128xbf16> to vector<16x128xf32>
    %8 = arith.addf %5, %7 : vector<16x128xf32>
    %9 = arith.truncf %8 : vector<16x128xf32> to vector<16x128xbf16>
    %c0_7 = arith.constant 0 : index
    %c0_8 = arith.constant 0 : index
    %10 = vector.load %arg6[%c0_7, %c0_8] : memref<16x128xbf16, #tpu.memory_space<vmem>>, vector<16x128xbf16>
    tpu.vector_store %arg6[%c0_7, %c0_8], %9 {strides = array<i32>} : memref<16x128xbf16, #tpu.memory_space<vmem>>, vector<16x128xbf16>,
    return
  }
  func.func @transform_0(%arg0: i32, %arg1: i32) -> (i32, i32) {
    %c0_i32 = arith.constant 0 : i32
    %c0_i32_0 = arith.constant 0 : i32
    return %arg0, %c0_i32 : i32, i32
  }
  func.func @transform_1(%arg0: i32, %arg1: i32) -> (i32, i32) {
    %c0_i32 = arith.constant 0 : i32
    %c0_i32_0 = arith.constant 0 : i32
    return %c0_i32, %arg1 : i32, i32
  }
  func.func @transform_2(%arg0: i32, %arg1: i32) -> (i32, i32) {
    %c0_i32 = arith.constant 0 : i32
    %c0_i32_0 = arith.constant 0 : i32
    return %c0_i32, %arg1 : i32, i32
  }
  func.func @transform_3(%arg0: i32, %arg1: i32) -> (i32, i32) {
    %c0_i32 = arith.constant 0 : i32
    return %arg0, %arg1 : i32, i32
  }
  func.func @transform_4(%arg0: i32, %arg1: i32) -> (i32, i32) {
    %c0_i32 = arith.constant 0 : i32
    return %arg0, %arg1 : i32, i32
  }
}

module attributes {stable_mosaic.version = 11 : i64} {
  func.func @_attention_kernel(%arg0: i32, %arg1: memref<1x2x8x64xbf16, #tpu.memory_space<vmem>>, %arg2: memref<1x2x8x64xbf16, #tpu.memory_space<vmem>>, %arg3: memref<1x2x8x64xbf16, #tpu.memory_space<vmem>>, %arg4: memref<1x1x8xi32, #tpu.memory_space<vmem>>, %arg5: memref<1x2x8x64xbf16, #tpu.memory_space<vmem>>) attributes {dimension_semantics = [#tpu.dimension_semantics<parallel>], iteration_bounds = array<i64: 2>, scalar_prefetch = 0 : i64, scratch_operands = 0 : i64, tpu.core_type = #tpu.core_type<tc>, window_params = [{transform_indices = @transform_0, window_bounds = array<i64: 1, 2, 8, 64>}, {transform_indices = @transform_1, window_bounds = array<i64: 1, 2, 8, 64>}, {transform_indices = @transform_2, window_bounds = array<i64: 1, 2, 8, 64>}, {transform_indices = @transform_3, window_bounds = array<i64: 1, 1, 8>}, {transform_indices = @transform_4, window_bounds = array<i64: 1, 2, 8, 64>}]} {
    %c0 = arith.constant 0 : index
    %c0_0 = arith.constant 0 : index
    %c0_1 = arith.constant 0 : index
    %c0_2 = arith.constant 0 : index
    %0 = vector.load %arg1[%c0, %c0_0, %c0_1, %c0_2] : memref<1x2x8x64xbf16, #tpu.memory_space<vmem>>, vector<1x2x8x64xbf16>
    %1 = vector.shape_cast %0 : vector<1x2x8x64xbf16> to vector<2x8x64xbf16>
    %2 = arith.extf %1 : vector<2x8x64xbf16> to vector<2x8x64xf32>
    %cst = arith.constant 1.250000e-01 : f32
    %3 = vector.broadcast %cst : f32 to vector<2x8x64xf32>
    %4 = arith.mulf %2, %3 : vector<2x8x64xf32>
    %5 = arith.truncf %4 : vector<2x8x64xf32> to vector<2x8x64xbf16>
    %c0_3 = arith.constant 0 : index
    %c0_4 = arith.constant 0 : index
    %c0_5 = arith.constant 0 : index
    %c0_6 = arith.constant 0 : index
    %6 = vector.load %arg2[%c0_3, %c0_4, %c0_5, %c0_6] : memref<1x2x8x64xbf16, #tpu.memory_space<vmem>>, vector<1x2x8x64xbf16>
    %7 = vector.shape_cast %6 : vector<1x2x8x64xbf16> to vector<2x8x64xbf16>
    %c0_7 = arith.constant 0 : index
    %c0_8 = arith.constant 0 : index
    %c0_9 = arith.constant 0 : index
    %c0_10 = arith.constant 0 : index
    %8 = vector.load %arg3[%c0_7, %c0_8, %c0_9, %c0_10] : memref<1x2x8x64xbf16, #tpu.memory_space<vmem>>, vector<1x2x8x64xbf16>
    %9 = vector.shape_cast %8 : vector<1x2x8x64xbf16> to vector<2x8x64xbf16>
    "tpu.trace_start"() <{level = 10 : i32, message = "hqd,hkd->hqk"}> : () -> ()
    %cst_11 = arith.constant dense<0.000000e+00> : vector<2x8x8xf32>
    %10 = tpu.matmul %5, %7, %cst_11 {dimension_numbers = #tpu.dot_dimension_numbers<[2], [2], [1], [1], [0, 0, 0, 1, 1, 1], [0], [0]>} : vector<2x8x64xbf16>, vector<2x8x64xbf16>, vector<2x8x8xf32> -> vector<2x8x8xf32>
    "tpu.trace_stop"() : () -> ()
    %11 = tpu.iota {dimensions = array<i32: 0>} : vector<8x8xi32>
    %12 = tpu.iota {dimensions = array<i32: 1>} : vector<8x8xi32>
    %c0_12 = arith.constant 0 : index
    %c0_13 = arith.constant 0 : index
    %c0_14 = arith.constant 0 : index
    %13 = vector.load %arg4[%c0_12, %c0_13, %c0_14] : memref<1x1x8xi32, #tpu.memory_space<vmem>>, vector<1x1x8xi32>
    %14 = vector.shape_cast %13 : vector<1x1x8xi32> to vector<1x8xi32>
    %c0_i32 = arith.constant 0 : i32
    %15 = vector.broadcast %c0_i32 : i32 to vector<1x8xi32>
    %16 = arith.cmpi sgt, %14, %15 : vector<1x8xi32>
    %17 = arith.cmpi sle, %12, %11 : vector<8x8xi32>
    %18 = vector.broadcast %16 : vector<1x8xi1> to vector<8x8xi1>
    %19 = arith.andi %17, %18 : vector<8x8xi1>
    %20 = vector.shape_cast %19 : vector<8x8xi1> to vector<1x8x8xi1>
    %cst_15 = arith.constant -1.000000e+09 : f32
    %21 = vector.shape_cast %20 : vector<1x8x8xi1> to vector<1x8x8xi1>
    %22 = vector.broadcast %21 : vector<1x8x8xi1> to vector<2x8x8xi1>
    %23 = vector.broadcast %cst_15 : f32 to vector<2x8x8xf32>
    %24 = arith.select %22, %10, %23 : vector<2x8x8xi1>, vector<2x8x8xf32>
    %cst_16 = arith.constant dense<0xFF800000> : vector<2x8xf32>
    %25 = vector.multi_reduction <maximumf>, %24, %cst_16 [2] : vector<2x8x8xf32> to vector<2x8xf32>
    %26 = vector.shape_cast %25 : vector<2x8xf32> to vector<2x8x1xf32>
    %27 = vector.broadcast %26 : vector<2x8x1xf32> to vector<2x8x8xf32>
    %28 = arith.subf %24, %27 : vector<2x8x8xf32>
    %29 = math.exp %28 : vector<2x8x8xf32>
    %cst_17 = arith.constant dense<0.000000e+00> : vector<2x8xf32>
    %30 = vector.multi_reduction <add>, %29, %cst_17 [2] : vector<2x8x8xf32> to vector<2x8xf32>
    %31 = vector.shape_cast %30 : vector<2x8xf32> to vector<2x8x1xf32>
    %32 = tpu.reciprocal %31 {approx = true} : vector<2x8x1xf32> -> vector<2x8x1xf32>
    %33 = vector.broadcast %32 : vector<2x8x1xf32> to vector<2x8x8xf32>
    %34 = arith.mulf %29, %33 : vector<2x8x8xf32>
    %35 = arith.truncf %34 : vector<2x8x8xf32> to vector<2x8x8xbf16>
    "tpu.trace_start"() <{level = 10 : i32, message = "hqk,hkd->hqd"}> : () -> ()
    %cst_18 = arith.constant dense<0.000000e+00> : vector<2x8x64xf32>
    %36 = tpu.matmul %35, %9, %cst_18 {dimension_numbers = #tpu.dot_dimension_numbers<[2], [1], [1], [2], [0, 0, 0, 1, 1, 2], [0], [0]>} : vector<2x8x8xbf16>, vector<2x8x64xbf16>, vector<2x8x64xf32> -> vector<2x8x64xf32>
    "tpu.trace_stop"() : () -> ()
    %37 = arith.truncf %36 : vector<2x8x64xf32> to vector<2x8x64xbf16>
    %c0_19 = arith.constant 0 : index
    %c0_20 = arith.constant 0 : index
    %c0_21 = arith.constant 0 : index
    %c0_22 = arith.constant 0 : index
    %38 = vector.load %arg5[%c0_19, %c0_20, %c0_21, %c0_22] : memref<1x2x8x64xbf16, #tpu.memory_space<vmem>>, vector<1x2x8x64xbf16>
    %39 = vector.shape_cast %38 : vector<1x2x8x64xbf16> to vector<2x8x64xbf16>
    %40 = vector.shape_cast %37 : vector<2x8x64xbf16> to vector<1x2x8x64xbf16>
    tpu.vector_store %arg5[%c0_19, %c0_20, %c0_21, %c0_22], %40 {strides = array<i32>} : memref<1x2x8x64xbf16, #tpu.memory_space<vmem>>, vector<1x2x8x64xbf16>,
    return
  }
  func.func @transform_0(%arg0: i32) -> (i32, i32, i32, i32) {
    %c0_i32 = arith.constant 0 : i32
    %c0_i32_0 = arith.constant 0 : i32
    %c0_i32_1 = arith.constant 0 : i32
    %c0_i32_2 = arith.constant 0 : i32
    return %arg0, %c0_i32, %c0_i32_0, %c0_i32_1 : i32, i32, i32, i32
  }
  func.func @transform_1(%arg0: i32) -> (i32, i32, i32, i32) {
    %c0_i32 = arith.constant 0 : i32
    %c0_i32_0 = arith.constant 0 : i32
    %c0_i32_1 = arith.constant 0 : i32
    %c0_i32_2 = arith.constant 0 : i32
    return %arg0, %c0_i32, %c0_i32_0, %c0_i32_1 : i32, i32, i32, i32
  }
  func.func @transform_2(%arg0: i32) -> (i32, i32, i32, i32) {
    %c0_i32 = arith.constant 0 : i32
    %c0_i32_0 = arith.constant 0 : i32
    %c0_i32_1 = arith.constant 0 : i32
    %c0_i32_2 = arith.constant 0 : i32
    return %arg0, %c0_i32, %c0_i32_0, %c0_i32_1 : i32, i32, i32, i32
  }
  func.func @transform_3(%arg0: i32) -> (i32, i32, i32) {
    %c0_i32 = arith.constant 0 : i32
    %c0_i32_0 = arith.constant 0 : i32
    %c0_i32_1 = arith.constant 0 : i32
    return %arg0, %c0_i32, %c0_i32_0 : i32, i32, i32
  }
  func.func @transform_4(%arg0: i32) -> (i32, i32, i32, i32) {
    %c0_i32 = arith.constant 0 : i32
    %c0_i32_0 = arith.constant 0 : i32
    %c0_i32_1 = arith.constant 0 : i32
    %c0_i32_2 = arith.constant 0 : i32
    return %arg0, %c0_i32, %c0_i32_0, %c0_i32_1 : i32, i32, i32, i32
  }
}

module attributes {stable_mosaic.version = 11 : i64} {
  func.func @_ffn_kernel(%arg0: i32, %arg1: i32, %arg2: memref<16x128xbf16, #tpu.memory_space<vmem>>, %arg3: memref<1x128xf32, #tpu.memory_space<vmem>>, %arg4: memref<1x128xf32, #tpu.memory_space<vmem>>, %arg5: memref<128x512xbf16, #tpu.memory_space<vmem>>, %arg6: memref<1x512xf32, #tpu.memory_space<vmem>>, %arg7: memref<512x128xbf16, #tpu.memory_space<vmem>>, %arg8: memref<1x128xf32, #tpu.memory_space<vmem>>, %arg9: memref<16x128xbf16, #tpu.memory_space<vmem>>, %arg10: memref<16x128xbf16, #tpu.memory_space<vmem>>, %arg11: memref<16x128xf32, #tpu.memory_space<vmem>>) attributes {dimension_semantics = [#tpu.dimension_semantics<parallel>, #tpu.dimension_semantics<arbitrary>], iteration_bounds = array<i64: 1, 1>, scalar_prefetch = 0 : i64, scratch_operands = 2 : i64, tpu.core_type = #tpu.core_type<tc>, window_params = [{transform_indices = @transform_0, window_bounds = array<i64: 16, 128>}, {pipeline_mode = #tpu.pipeline_mode<synchronous>, transform_indices = @transform_1, window_bounds = array<i64: 1, 128>}, {pipeline_mode = #tpu.pipeline_mode<synchronous>, transform_indices = @transform_2, window_bounds = array<i64: 1, 128>}, {transform_indices = @transform_3, window_bounds = array<i64: 128, 512>}, {transform_indices = @transform_4, window_bounds = array<i64: 1, 512>}, {transform_indices = @transform_5, window_bounds = array<i64: 512, 128>}, {pipeline_mode = #tpu.pipeline_mode<synchronous>, transform_indices = @transform_6, window_bounds = array<i64: 1, 128>}, {transform_indices = @transform_7, window_bounds = array<i64: 16, 128>}]} {
    %c0_i32 = arith.constant 0 : i32
    %0 = arith.cmpi eq, %arg1, %c0_i32 : i32
    %1 = arith.extui %0 : i1 to i32
    %c0_i32_0 = arith.constant 0 : i32
    %2 = arith.cmpi ne, %1, %c0_i32_0 : i32
    scf.if %2 {
      %c0_19 = arith.constant 0 : index
      %c0_20 = arith.constant 0 : index
      %31 = vector.load %arg2[%c0_19, %c0_20] : memref<16x128xbf16, #tpu.memory_space<vmem>>, vector<16x128xbf16>
      %c0_21 = arith.constant 0 : index
      %c0_22 = arith.constant 0 : index
      %32 = vector.load %arg3[%c0_21, %c0_22] : memref<1x128xf32, #tpu.memory_space<vmem>>, vector<1x128xf32>
      %c0_23 = arith.constant 0 : index
      %c0_24 = arith.constant 0 : index
      %33 = vector.load %arg4[%c0_23, %c0_24] : memref<1x128xf32, #tpu.memory_space<vmem>>, vector<1x128xf32>
      %34 = arith.extf %31 : vector<16x128xbf16> to vector<16x128xf32>
      %cst_25 = arith.constant dense<0.000000e+00> : vector<16xf32>
      %35 = vector.multi_reduction <add>, %34, %cst_25 [1] : vector<16x128xf32> to vector<16xf32>
      %36 = vector.shape_cast %35 : vector<16xf32> to vector<16x1xf32>
      %cst_26 = arith.constant 1.280000e+02 : f32
      %37 = vector.broadcast %cst_26 : f32 to vector<16x1xf32>
      %38 = arith.divf %36, %37 : vector<16x1xf32>
      %39 = vector.broadcast %38 : vector<16x1xf32> to vector<16x128xf32>
      %40 = arith.subf %34, %39 : vector<16x128xf32>
      %41 = arith.mulf %40, %40 : vector<16x128xf32>
      %cst_27 = arith.constant dense<0.000000e+00> : vector<16xf32>
      %42 = vector.multi_reduction <add>, %41, %cst_27 [1] : vector<16x128xf32> to vector<16xf32>
      %43 = vector.shape_cast %42 : vector<16xf32> to vector<16x1xf32>
      %cst_28 = arith.constant 1.280000e+02 : f32
      %44 = vector.broadcast %cst_28 : f32 to vector<16x1xf32>
      %45 = arith.divf %43, %44 : vector<16x1xf32>
      %cst_29 = arith.constant 9.99999997E-7 : f32
      %46 = vector.broadcast %cst_29 : f32 to vector<16x1xf32>
      %47 = arith.addf %45, %46 : vector<16x1xf32>
      %48 = math.rsqrt %47 : vector<16x1xf32>
      %49 = vector.broadcast %48 : vector<16x1xf32> to vector<16x128xf32>
      %50 = arith.mulf %40, %49 : vector<16x128xf32>
      %51 = vector.broadcast %32 : vector<1x128xf32> to vector<16x128xf32>
      %52 = arith.mulf %50, %51 : vector<16x128xf32>
      %53 = vector.broadcast %33 : vector<1x128xf32> to vector<16x128xf32>
      %54 = arith.addf %52, %53 : vector<16x128xf32>
      %55 = arith.truncf %54 : vector<16x128xf32> to vector<16x128xbf16>
      %c0_30 = arith.constant 0 : index
      %c0_31 = arith.constant 0 : index
      %56 = vector.load %arg10[%c0_30, %c0_31] : memref<16x128xbf16, #tpu.memory_space<vmem>>, vector<16x128xbf16>
      tpu.vector_store %arg10[%c0_30, %c0_31], %55 {strides = array<i32>} : memref<16x128xbf16, #tpu.memory_space<vmem>>, vector<16x128xbf16>,
      %cst_32 = arith.constant 0.000000e+00 : f32
      %57 = vector.broadcast %cst_32 : f32 to vector<16x128xf32>
      %c0_33 = arith.constant 0 : index
      %c0_34 = arith.constant 0 : index
      %58 = vector.load %arg11[%c0_33, %c0_34] : memref<16x128xf32, #tpu.memory_space<vmem>>, vector<16x128xf32>
      tpu.vector_store %arg11[%c0_33, %c0_34], %57 {strides = array<i32>} : memref<16x128xf32, #tpu.memory_space<vmem>>, vector<16x128xf32>,
    } else {
    }
    %c0 = arith.constant 0 : index
    %c0_1 = arith.constant 0 : index
    %3 = vector.load %arg10[%c0, %c0_1] : memref<16x128xbf16, #tpu.memory_space<vmem>>, vector<16x128xbf16>
    %c0_2 = arith.constant 0 : index
    %c0_3 = arith.constant 0 : index
    %4 = vector.load %arg5[%c0_2, %c0_3] : memref<128x512xbf16, #tpu.memory_space<vmem>>, vector<128x512xbf16>
    %cst = arith.constant dense<0.000000e+00> : vector<16x512xf32>
    %5 = tpu.matmul %3, %4, %cst {dimension_numbers = #tpu.dot_dimension_numbers<[1], [0], [0], [1], [0, 0, 1, 1], [], []>} : vector<16x128xbf16>, vector<128x512xbf16>, vector<16x512xf32> -> vector<16x512xf32>
    %c0_4 = arith.constant 0 : index
    %c0_5 = arith.constant 0 : index
    %6 = vector.load %arg6[%c0_4, %c0_5] : memref<1x512xf32, #tpu.memory_space<vmem>>, vector<1x512xf32>
    %7 = vector.broadcast %6 : vector<1x512xf32> to vector<16x512xf32>
    %8 = arith.addf %5, %7 : vector<16x512xf32>
    %cst_6 = arith.constant 5.000000e-01 : f32
    %9 = vector.broadcast %cst_6 : f32 to vector<16x512xf32>
    %10 = arith.mulf %9, %8 : vector<16x512xf32>
    %cst_7 = arith.constant 4.471500e-02 : f32
    %11 = vector.broadcast %cst_7 : f32 to vector<16x512xf32>
    %12 = arith.mulf %11, %8 : vector<16x512xf32>
    %13 = arith.mulf %12, %8 : vector<16x512xf32>
    %14 = arith.mulf %13, %8 : vector<16x512xf32>
    %15 = arith.addf %8, %14 : vector<16x512xf32>
    %cst_8 = arith.constant 0.797884583 : f32
    %16 = vector.broadcast %cst_8 : f32 to vector<16x512xf32>
    %17 = arith.mulf %16, %15 : vector<16x512xf32>
    %18 = math.tanh %17 : vector<16x512xf32>
    %cst_9 = arith.constant 1.000000e+00 : f32
    %19 = vector.broadcast %cst_9 : f32 to vector<16x512xf32>
    %20 = arith.addf %19, %18 : vector<16x512xf32>
    %21 = arith.mulf %10, %20 : vector<16x512xf32>
    %c0_10 = arith.constant 0 : index
    %c0_11 = arith.constant 0 : index
    %22 = vector.load %arg11[%c0_10, %c0_11] : memref<16x128xf32, #tpu.memory_space<vmem>>, vector<16x128xf32>
    %23 = arith.truncf %21 : vector<16x512xf32> to vector<16x512xbf16>
    %c0_12 = arith.constant 0 : index
    %c0_13 = arith.constant 0 : index
    %24 = vector.load %arg7[%c0_12, %c0_13] : memref<512x128xbf16, #tpu.memory_space<vmem>>, vector<512x128xbf16>
    %cst_14 = arith.constant dense<0.000000e+00> : vector<16x128xf32>
    %25 = tpu.matmul %23, %24, %cst_14 {dimension_numbers = #tpu.dot_dimension_numbers<[1], [0], [0], [1], [0, 0, 1, 1], [], []>} : vector<16x512xbf16>, vector<512x128xbf16>, vector<16x128xf32> -> vector<16x128xf32>
    %26 = arith.addf %22, %25 : vector<16x128xf32>
    %c0_15 = arith.constant 0 : index
    %c0_16 = arith.constant 0 : index
    %27 = vector.load %arg11[%c0_15, %c0_16] : memref<16x128xf32, #tpu.memory_space<vmem>>, vector<16x128xf32>
    tpu.vector_store %arg11[%c0_15, %c0_16], %26 {strides = array<i32>} : memref<16x128xf32, #tpu.memory_space<vmem>>, vector<16x128xf32>,
    %c0_i32_17 = arith.constant 0 : i32
    %28 = arith.cmpi eq, %arg1, %c0_i32_17 : i32
    %29 = arith.extui %28 : i1 to i32
    %c0_i32_18 = arith.constant 0 : i32
    %30 = arith.cmpi ne, %29, %c0_i32_18 : i32
    scf.if %30 {
      %c0_19 = arith.constant 0 : index
      %c0_20 = arith.constant 0 : index
      %31 = vector.load %arg11[%c0_19, %c0_20] : memref<16x128xf32, #tpu.memory_space<vmem>>, vector<16x128xf32>
      %c0_21 = arith.constant 0 : index
      %c0_22 = arith.constant 0 : index
      %32 = vector.load %arg8[%c0_21, %c0_22] : memref<1x128xf32, #tpu.memory_space<vmem>>, vector<1x128xf32>
      %33 = vector.broadcast %32 : vector<1x128xf32> to vector<16x128xf32>
      %34 = arith.addf %31, %33 : vector<16x128xf32>
      %c0_23 = arith.constant 0 : index
      %c0_24 = arith.constant 0 : index
      %35 = vector.load %arg2[%c0_23, %c0_24] : memref<16x128xbf16, #tpu.memory_space<vmem>>, vector<16x128xbf16>
      %36 = arith.extf %35 : vector<16x128xbf16> to vector<16x128xf32>
      %37 = arith.addf %34, %36 : vector<16x128xf32>
      %38 = arith.truncf %37 : vector<16x128xf32> to vector<16x128xbf16>
      %c0_25 = arith.constant 0 : index
      %c0_26 = arith.constant 0 : index
      %39 = vector.load %arg9[%c0_25, %c0_26] : memref<16x128xbf16, #tpu.memory_space<vmem>>, vector<16x128xbf16>
      tpu.vector_store %arg9[%c0_25, %c0_26], %38 {strides = array<i32>} : memref<16x128xbf16, #tpu.memory_space<vmem>>, vector<16x128xbf16>,
    } else {
    }
    return
  }
  func.func @transform_0(%arg0: i32, %arg1: i32) -> (i32, i32) {
    %c0_i32 = arith.constant 0 : i32
    %c0_i32_0 = arith.constant 0 : i32
    return %arg0, %c0_i32 : i32, i32
  }
  func.func @transform_1(%arg0: i32, %arg1: i32) -> (i32, i32) {
    %c0_i32 = arith.constant 0 : i32
    %c0_i32_0 = arith.constant 0 : i32
    %c0_i32_1 = arith.constant 0 : i32
    return %c0_i32, %c0_i32_0 : i32, i32
  }
  func.func @transform_2(%arg0: i32, %arg1: i32) -> (i32, i32) {
    %c0_i32 = arith.constant 0 : i32
    %c0_i32_0 = arith.constant 0 : i32
    %c0_i32_1 = arith.constant 0 : i32
    return %c0_i32, %c0_i32_0 : i32, i32
  }
  func.func @transform_3(%arg0: i32, %arg1: i32) -> (i32, i32) {
    %c0_i32 = arith.constant 0 : i32
    %c0_i32_0 = arith.constant 0 : i32
    return %c0_i32, %arg1 : i32, i32
  }
  func.func @transform_4(%arg0: i32, %arg1: i32) -> (i32, i32) {
    %c0_i32 = arith.constant 0 : i32
    %c0_i32_0 = arith.constant 0 : i32
    return %c0_i32, %arg1 : i32, i32
  }
  func.func @transform_5(%arg0: i32, %arg1: i32) -> (i32, i32) {
    %c0_i32 = arith.constant 0 : i32
    %c0_i32_0 = arith.constant 0 : i32
    return %arg1, %c0_i32 : i32, i32
  }
  func.func @transform_6(%arg0: i32, %arg1: i32) -> (i32, i32) {
    %c0_i32 = arith.constant 0 : i32
    %c0_i32_0 = arith.constant 0 : i32
    %c0_i32_1 = arith.constant 0 : i32
    return %c0_i32, %c0_i32_0 : i32, i32
  }
  func.func @transform_7(%arg0: i32, %arg1: i32) -> (i32, i32) {
    %c0_i32 = arith.constant 0 : i32
    %c0_i32_0 = arith.constant 0 : i32
    return %arg0, %c0_i32 : i32, i32
  }
}

module attributes {stable_mosaic.version = 11 : i64} {
  func.func @_ln_linear_kernel(%arg0: i32, %arg1: i32, %arg2: memref<16x128xbf16, #tpu.memory_space<vmem>>, %arg3: memref<1x128xf32, #tpu.memory_space<vmem>>, %arg4: memref<1x128xf32, #tpu.memory_space<vmem>>, %arg5: memref<128x256xbf16, #tpu.memory_space<vmem>>, %arg6: memref<1x256xf32, #tpu.memory_space<vmem>>, %arg7: memref<16x256xf32, #tpu.memory_space<vmem>>, %arg8: memref<16x128xbf16, #tpu.memory_space<vmem>>) attributes {dimension_semantics = [#tpu.dimension_semantics<parallel>, #tpu.dimension_semantics<arbitrary>], iteration_bounds = array<i64: 1, 1>, scalar_prefetch = 0 : i64, scratch_operands = 1 : i64, tpu.core_type = #tpu.core_type<tc>, window_params = [{transform_indices = @transform_0, window_bounds = array<i64: 16, 128>}, {pipeline_mode = #tpu.pipeline_mode<synchronous>, transform_indices = @transform_1, window_bounds = array<i64: 1, 128>}, {pipeline_mode = #tpu.pipeline_mode<synchronous>, transform_indices = @transform_2, window_bounds = array<i64: 1, 128>}, {transform_indices = @transform_3, window_bounds = array<i64: 128, 256>}, {transform_indices = @transform_4, window_bounds = array<i64: 1, 256>}, {transform_indices = @transform_5, window_bounds = array<i64: 16, 256>}]} {
    %c0_i32 = arith.constant 0 : i32
    %0 = arith.cmpi eq, %arg1, %c0_i32 : i32
    %1 = arith.extui %0 : i1 to i32
    %c0_i32_0 = arith.constant 0 : i32
    %2 = arith.cmpi ne, %1, %c0_i32_0 : i32
    scf.if %2 {
      %c0_8 = arith.constant 0 : index
      %c0_9 = arith.constant 0 : index
      %10 = vector.load %arg2[%c0_8, %c0_9] : memref<16x128xbf16, #tpu.memory_space<vmem>>, vector<16x128xbf16>
      %c0_10 = arith.constant 0 : index
      %c0_11 = arith.constant 0 : index
      %11 = vector.load %arg3[%c0_10, %c0_11] : memref<1x128xf32, #tpu.memory_space<vmem>>, vector<1x128xf32>
      %c0_12 = arith.constant 0 : index
      %c0_13 = arith.constant 0 : index
      %12 = vector.load %arg4[%c0_12, %c0_13] : memref<1x128xf32, #tpu.memory_space<vmem>>, vector<1x128xf32>
      %13 = arith.extf %10 : vector<16x128xbf16> to vector<16x128xf32>
      %cst_14 = arith.constant dense<0.000000e+00> : vector<16xf32>
      %14 = vector.multi_reduction <add>, %13, %cst_14 [1] : vector<16x128xf32> to vector<16xf32>
      %15 = vector.shape_cast %14 : vector<16xf32> to vector<16x1xf32>
      %cst_15 = arith.constant 1.280000e+02 : f32
      %16 = vector.broadcast %cst_15 : f32 to vector<16x1xf32>
      %17 = arith.divf %15, %16 : vector<16x1xf32>
      %18 = vector.broadcast %17 : vector<16x1xf32> to vector<16x128xf32>
      %19 = arith.subf %13, %18 : vector<16x128xf32>
      %20 = arith.mulf %19, %19 : vector<16x128xf32>
      %cst_16 = arith.constant dense<0.000000e+00> : vector<16xf32>
      %21 = vector.multi_reduction <add>, %20, %cst_16 [1] : vector<16x128xf32> to vector<16xf32>
      %22 = vector.shape_cast %21 : vector<16xf32> to vector<16x1xf32>
      %cst_17 = arith.constant 1.280000e+02 : f32
      %23 = vector.broadcast %cst_17 : f32 to vector<16x1xf32>
      %24 = arith.divf %22, %23 : vector<16x1xf32>
      %cst_18 = arith.constant 9.99999997E-7 : f32
      %25 = vector.broadcast %cst_18 : f32 to vector<16x1xf32>
      %26 = arith.addf %24, %25 : vector<16x1xf32>
      %27 = math.rsqrt %26 : vector<16x1xf32>
      %28 = vector.broadcast %27 : vector<16x1xf32> to vector<16x128xf32>
      %29 = arith.mulf %19, %28 : vector<16x128xf32>
      %30 = vector.broadcast %11 : vector<1x128xf32> to vector<16x128xf32>
      %31 = arith.mulf %29, %30 : vector<16x128xf32>
      %32 = vector.broadcast %12 : vector<1x128xf32> to vector<16x128xf32>
      %33 = arith.addf %31, %32 : vector<16x128xf32>
      %34 = arith.truncf %33 : vector<16x128xf32> to vector<16x128xbf16>
      %c0_19 = arith.constant 0 : index
      %c0_20 = arith.constant 0 : index
      %35 = vector.load %arg8[%c0_19, %c0_20] : memref<16x128xbf16, #tpu.memory_space<vmem>>, vector<16x128xbf16>
      tpu.vector_store %arg8[%c0_19, %c0_20], %34 {strides = array<i32>} : memref<16x128xbf16, #tpu.memory_space<vmem>>, vector<16x128xbf16>,
    } else {
    }
    %c0 = arith.constant 0 : index
    %c0_1 = arith.constant 0 : index
    %3 = vector.load %arg8[%c0, %c0_1] : memref<16x128xbf16, #tpu.memory_space<vmem>>, vector<16x128xbf16>
    %c0_2 = arith.constant 0 : index
    %c0_3 = arith.constant 0 : index
    %4 = vector.load %arg5[%c0_2, %c0_3] : memref<128x256xbf16, #tpu.memory_space<vmem>>, vector<128x256xbf16>
    %cst = arith.constant dense<0.000000e+00> : vector<16x256xf32>
    %5 = tpu.matmul %3, %4, %cst {dimension_numbers = #tpu.dot_dimension_numbers<[1], [0], [0], [1], [0, 0, 1, 1], [], []>} : vector<16x128xbf16>, vector<128x256xbf16>, vector<16x256xf32> -> vector<16x256xf32>
    %c0_4 = arith.constant 0 : index
    %c0_5 = arith.constant 0 : index
    %6 = vector.load %arg6[%c0_4, %c0_5] : memref<1x256xf32, #tpu.memory_space<vmem>>, vector<1x256xf32>
    %7 = vector.broadcast %6 : vector<1x256xf32> to vector<16x256xf32>
    %8 = arith.addf %5, %7 : vector<16x256xf32>
    %c0_6 = arith.constant 0 : index
    %c0_7 = arith.constant 0 : index
    %9 = vector.load %arg7[%c0_6, %c0_7] : memref<16x256xf32, #tpu.memory_space<vmem>>, vector<16x256xf32>
    tpu.vector_store %arg7[%c0_6, %c0_7], %8 {strides = array<i32>} : memref<16x256xf32, #tpu.memory_space<vmem>>, vector<16x256xf32>,
    return
  }
  func.func @transform_0(%arg0: i32, %arg1: i32) -> (i32, i32) {
    %c0_i32 = arith.constant 0 : i32
    %c0_i32_0 = arith.constant 0 : i32
    return %arg0, %c0_i32 : i32, i32
  }
  func.func @transform_1(%arg0: i32, %arg1: i32) -> (i32, i32) {
    %c0_i32 = arith.constant 0 : i32
    %c0_i32_0 = arith.constant 0 : i32
    %c0_i32_1 = arith.constant 0 : i32
    return %c0_i32, %c0_i32_0 : i32, i32
  }
  func.func @transform_2(%arg0: i32, %arg1: i32) -> (i32, i32) {
    %c0_i32 = arith.constant 0 : i32
    %c0_i32_0 = arith.constant 0 : i32
    %c0_i32_1 = arith.constant 0 : i32
    return %c0_i32, %c0_i32_0 : i32, i32
  }
  func.func @transform_3(%arg0: i32, %arg1: i32) -> (i32, i32) {
    %c0_i32 = arith.constant 0 : i32
    %c0_i32_0 = arith.constant 0 : i32
    return %c0_i32, %arg1 : i32, i32
  }
  func.func @transform_4(%arg0: i32, %arg1: i32) -> (i32, i32) {
    %c0_i32 = arith.constant 0 : i32
    %c0_i32_0 = arith.constant 0 : i32
    return %c0_i32, %arg1 : i32, i32
  }
  func.func @transform_5(%arg0: i32, %arg1: i32) -> (i32, i32) {
    %c0_i32 = arith.constant 0 : i32
    return %arg0, %arg1 : i32, i32
  }
}

</mosaic_0001>

<llo_original>
// kernel: generate_lm_forward.10
$region0: #{generate_lm_forward.10}
  #allocation0 [shape = 'u32[]', space=smem, size = 0x4, offset = 0x4, fixed_abs, tag = 'smem constant byte address 0x4 - core index']
  #allocation1 [shape = 'u32[144,128]{1,0:T(1,128)}', space=vmem, size = 0x12000, scoped, tag = 'internal scratch']
  %s0 = inlined_call_operand.vmem [shape: f32[16,128], index: 0, kind: input, shape index: {}]
  %s1 = inlined_call_operand.vmem [shape: f32[16,128], index: 1, kind: input, shape index: {}]
  %s2 = inlined_call_operand.vmem [shape: bf16[16,128], index: 2, kind: output, shape index: {}]
  %s3 = sld [smem:[#allocation0]]
  $region18: #{generate_lm_forward.10} parent=0
    _
  %s5 = ssub.s32 1, %s3
  %s6 = scalar_select 0, %s5, %s3
  // Predicated region
  $region2: #{generate_lm_forward.10} parent=0 // pred_check
    _
  $region3: #{generate_lm_forward.10} parent=0 // pred_check_branch
    %8 = sbr.rel (0) target = $region5
  $region4: #{generate_lm_forward.10} parent=0 // pred_region
    _
  $region5: #{generate_lm_forward.10} parent=0 // pred_fallthru
    _
  // Predicated region
  $region6: #{generate_lm_forward.10} parent=0 // pred_check
    _
  $region7: #{generate_lm_forward.10} parent=0 // pred_check_branch
    %10 = sbr.rel (0) target = $region9
  $region8: #{generate_lm_forward.10} parent=0 // pred_region
    _
  $region9: #{generate_lm_forward.10} parent=0 // pred_fallthru
    _
  %v11 = vld [vmem:[%s0] sm:$0xff]
  %v12 = vld [vmem:[%s0 + $0x8] sm:$0xff]
  %v13 = vld [vmem:[%s1] sm:$0xff]
  %v14 = vld [vmem:[%s1 + $0x8] sm:$0xff]
  %v15 = vadd.f32 %v11, %v13
  %v16 = vadd.f32 %v12, %v14
  %v17 = vpack.c.bf16 %v16, %v15
  %v19 = vunpack.c.l.b16 %v17
  %v20 = vunpack.c.h.b16 %v17
  %v21 = vpack.c.b16 %v19, %v19
  %v22 = vpack.c.b16 %v20, %v20
  %25 = vst [vmem:[%s2] sm:$0xf] %v21
  %26 = vst [vmem:[%s2 + $0x4] sm:$0xf] %v22
  // Predicated region
  $region10: #{generate_lm_forward.10} parent=0 // pred_check
    _
  $region11: #{generate_lm_forward.10} parent=0 // pred_check_branch
    %28 = sbr.rel (0) target = $region13
  $region12: #{generate_lm_forward.10} parent=0 // pred_region
    _
  $region13: #{generate_lm_forward.10} parent=0 // pred_fallthru
    _
  // Predicated region
  $region14: #{generate_lm_forward.10} parent=0 // pred_check
    _
  $region15: #{generate_lm_forward.10} parent=0 // pred_check_branch
    %30 = sbr.rel (0) target = $region17
  $region16: #{generate_lm_forward.10} parent=0 // pred_region
    _
  $region17: #{generate_lm_forward.10} parent=0 // pred_fallthru
    _

// kernel: generate_lm_forward.13
$region0: #{generate_lm_forward.13}
  #allocation0 [shape = 'u32[]', space=smem, size = 0x4, offset = 0x4, fixed_abs, tag = 'smem constant byte address 0x4 - core index']
  #allocation1 [shape = 'u32[144,128]{1,0:T(1,128)}', space=vmem, size = 0x12000, scoped, tag = 'internal scratch']
  %s0 = inlined_call_operand.vmem [shape: bf16[16,128], index: 0, kind: input, shape index: {}]
  %s1 = inlined_call_operand.vmem [shape: bf16[128,128], index: 1, kind: input, shape index: {}]
  %s2 = inlined_call_operand.vmem [shape: f32[1,128], index: 2, kind: input, shape index: {}]
  %s3 = inlined_call_operand.vmem [shape: bf16[16,128], index: 3, kind: input, shape index: {}]
  %s4 = inlined_call_operand.vmem [shape: bf16[16,128], index: 4, kind: output, shape index: {}]
  %s5 = sld [smem:[#allocation0]]
  $region26: #{generate_lm_forward.13} parent=0
    _
  %s7 = ssub.s32 1, %s5
  %s8 = scalar_select 0, %s7, %s5
  // Predicated region
  $region2: #{generate_lm_forward.13} parent=0 // pred_check
    _
  $region3: #{generate_lm_forward.13} parent=0 // pred_check_branch
    %10 = sbr.rel (0) target = $region5
  $region4: #{generate_lm_forward.13} parent=0 // pred_region
    _
  $region5: #{generate_lm_forward.13} parent=0 // pred_fallthru
    _
  // Predicated region
  $region6: #{generate_lm_forward.13} parent=0 // pred_check
    _
  $region7: #{generate_lm_forward.13} parent=0 // pred_check_branch
    %12 = sbr.rel (0) target = $region9
  $region8: #{generate_lm_forward.13} parent=0 // pred_region
    _
  $region9: #{generate_lm_forward.13} parent=0 // pred_fallthru
    _
  // Predicated region
  $region10: #{generate_lm_forward.13} parent=0 // pred_check
    _
  $region11: #{generate_lm_forward.13} parent=0 // pred_check_branch
    %14 = sbr.rel (0) target = $region13
  $region12: #{generate_lm_forward.13} parent=0 // pred_region
    _
  $region13: #{generate_lm_forward.13} parent=0 // pred_fallthru
    _
  // Predicated region
  $region14: #{generate_lm_forward.13} parent=0 // pred_check
    _
  $region15: #{generate_lm_forward.13} parent=0 // pred_check_branch
    %16 = sbr.rel (0) target = $region17
  $region16: #{generate_lm_forward.13} parent=0 // pred_region
    _
  $region17: #{generate_lm_forward.13} parent=0 // pred_fallthru
    _
  %v18 = vld [vmem:[%s0] sm:$0xf]
  %v19 = vld [vmem:[%s0 + $0x4] sm:$0xf]
  %v20 = vld [vmem:[%s1] sm:$0xf]
  %v21 = vld [vmem:[%s1 + $0x4] sm:$0xf]
  %v22 = vld [vmem:[%s1 + $0x8] sm:$0xf]
  %v23 = vld [vmem:[%s1 + $0xc] sm:$0xf]
  %v24 = vld [vmem:[%s1 + $0x10] sm:$0xf]
  %v25 = vld [vmem:[%s1 + $0x14] sm:$0xf]
  %v26 = vld [vmem:[%s1 + $0x18] sm:$0xf]
  %v27 = vld [vmem:[%s1 + $0x1c] sm:$0xf]
  %v28 = vld [vmem:[%s1 + $0x20] sm:$0xf]
  %v29 = vld [vmem:[%s1 + $0x24] sm:$0xf]
  %v30 = vld [vmem:[%s1 + $0x28] sm:$0xf]
  %v31 = vld [vmem:[%s1 + $0x2c] sm:$0xf]
  %v32 = vld [vmem:[%s1 + $0x30] sm:$0xf]
  %v33 = vld [vmem:[%s1 + $0x34] sm:$0xf]
  %v34 = vld [vmem:[%s1 + $0x38] sm:$0xf]
  %v35 = vld [vmem:[%s1 + $0x3c] sm:$0xf]
  %v36 = vld [vmem:[%s2] sm:$0x1]
  %v38 = vlaneseq
  %v39 = vshrl.u32 %v38, 7
  %v40 = vsub.s32 0, %v39
  %v41 = vrot.slane %v36, %v40
  %v45 = vunpack.c.l.b16 %v18
  %v46 = vunpack.c.l.b16 %v19
  %v47 = vpack.c.b16 %v46, %v45
  %v65 = vunpack.c.l.b16 %v20
  %v66 = vunpack.c.l.b16 %v21
  %v67 = vunpack.c.l.b16 %v22
  %v68 = vunpack.c.l.b16 %v23
  %v69 = vunpack.c.l.b16 %v24
  %v70 = vunpack.c.l.b16 %v25
  %v71 = vunpack.c.l.b16 %v26
  %v72 = vunpack.c.l.b16 %v27
  %v73 = vunpack.c.l.b16 %v28
  %v74 = vunpack.c.l.b16 %v29
  %v75 = vunpack.c.l.b16 %v30
  %v76 = vunpack.c.l.b16 %v31
  %v77 = vunpack.c.l.b16 %v32
  %v78 = vunpack.c.l.b16 %v33
  %v79 = vunpack.c.l.b16 %v34
  %v80 = vunpack.c.l.b16 %v35
  %v81 = vpack.c.b16 %v66, %v65
  %v82 = vpack.c.b16 %v68, %v67
  %v83 = vpack.c.b16 %v70, %v69
  %v84 = vpack.c.b16 %v72, %v71
  %v85 = vpack.c.b16 %v74, %v73
  %v86 = vpack.c.b16 %v76, %v75
  %v87 = vpack.c.b16 %v78, %v77
  %v88 = vpack.c.b16 %v80, %v79
  %97 = vmatprep.subr.bf16.mxu0 0
  %98 = vmatpush1.bf16.msra.mxu0 %v81
  %99 = vmatprep.subr.bf16.mxu0 0
  %100 = vmatpush1.bf16.msra.mxu0 %v82
  %101 = vmatprep.subr.bf16.mxu0 0
  %102 = vmatpush1.bf16.msra.mxu0 %v83
  %103 = vmatprep.subr.bf16.mxu0 0
  %104 = vmatpush1.bf16.msra.mxu0 %v84
  %105 = vmatprep.subr.bf16.mxu0 0
  %106 = vmatpush1.bf16.msra.mxu0 %v85
  %107 = vmatprep.subr.bf16.mxu0 0
  %108 = vmatpush1.bf16.msra.mxu0 %v86
  %109 = vmatprep.subr.bf16.mxu0 0
  %110 = vmatpush1.bf16.msra.mxu0 %v87
  %111 = vmatprep.subr.bf16.mxu0 0
  %112 = vmatpush1.bf16.msra.mxu0 %v88
  %113 = vmatprep.subr.bf16.mxu0 0
  %114 = vmatpush1.bf16.msra.mxu0 0
  %115 = vmatprep.subr.bf16.mxu0 0
  %116 = vmatpush1.bf16.msra.mxu0 0
  %117 = vmatprep.subr.bf16.mxu0 0
  %118 = vmatpush1.bf16.msra.mxu0 0
  %119 = vmatprep.subr.bf16.mxu0 0
  %120 = vmatpush1.bf16.msra.mxu0 0
  %121 = vmatprep.subr.bf16.mxu0 0
  %122 = vmatpush1.bf16.msra.mxu0 0
  %123 = vmatprep.subr.bf16.mxu0 0
  %124 = vmatpush1.bf16.msra.mxu0 0
  %125 = vmatprep.subr.bf16.mxu0 0
  %126 = vmatpush1.bf16.msra.mxu0 0
  %127 = vmatprep.subr.bf16.mxu0 0
  %128 = vmatpush1.bf16.msra.mxu0 0
  %129 = vmatprep.mubr.bf16.mxu0 0
  %130 = vmatmul.mubr.bf16.gmra.mrb[0].mxu0 %v47
  %v131 = vpop.f32.mrb[0].mxu0
  %v132 = vadd.f32 %v41, %v131
  %v133 = vpop.f32.mrb[0].mxu0
  %v134 = vpop.f32.mrb[0].mxu0
  %v135 = vadd.f32 %v41, %v134
  %v136 = vpop.f32.mrb[0].mxu0
  %137 = vdwg.mxu0
  %v138 = vld [vmem:[%s3] sm:$0xf]
  %v139 = vld [vmem:[%s3 + $0x4] sm:$0xf]
  %v140 = vunpack.c.l.bf16 %v138
  %v141 = vunpack.c.l.bf16 %v139
  %v142 = vadd.f32 %v132, %v140
  %v143 = vadd.f32 %v135, %v141
  %v144 = vpack.c.bf16 %v143, %v142
  %v146 = vunpack.c.l.b16 %v144
  %v147 = vunpack.c.h.b16 %v144
  %v148 = vpack.c.b16 %v146, %v146
  %v149 = vpack.c.b16 %v147, %v147
  %152 = vst [vmem:[%s4] sm:$0xf] %v148
  %153 = vst [vmem:[%s4 + $0x4] sm:$0xf] %v149
  // Predicated region
  $region18: #{generate_lm_forward.13} parent=0 // pred_check
    _
  $region19: #{generate_lm_forward.13} parent=0 // pred_check_branch
    %155 = sbr.rel (0) target = $region21
  $region20: #{generate_lm_forward.13} parent=0 // pred_region
    _
  $region21: #{generate_lm_forward.13} parent=0 // pred_fallthru
    _
  // Predicated region
  $region22: #{generate_lm_forward.13} parent=0 // pred_check
    _
  $region23: #{generate_lm_forward.13} parent=0 // pred_check_branch
    %157 = sbr.rel (0) target = $region25
  $region24: #{generate_lm_forward.13} parent=0 // pred_region
    _
  $region25: #{generate_lm_forward.13} parent=0 // pred_fallthru
    _

// kernel: generate_lm_forward.11
$region0: #{generate_lm_forward.11}
  #allocation0 [shape = 'u32[]', space=smem, size = 0x4, offset = 0x4, fixed_abs, tag = 'smem constant byte address 0x4 - core index']
  #allocation1 [shape = 'u32[144,128]{1,0:T(1,128)}', space=vmem, size = 0x12000, scoped, tag = 'internal scratch']
  #allocation2 [shape = 'bf16[16,128]{1,0:T(16,128)(2,1)}', space=vmem, size = 0x1000, scoped, tag = 'scratch operand']
  %s0 = inlined_call_operand.vmem [shape: bf16[16,128], index: 0, kind: input, shape index: {}]
  %s1 = inlined_call_operand.vmem [shape: f32[1,128], index: 1, kind: input, shape index: {}]
  %s2 = inlined_call_operand.vmem [shape: f32[1,128], index: 2, kind: input, shape index: {}]
  %s3 = inlined_call_operand.vmem [shape: bf16[128,384], index: 3, kind: input, shape index: {}]
  %s4 = inlined_call_operand.vmem [shape: f32[1,384], index: 4, kind: input, shape index: {}]
  %s5 = inlined_call_operand.vmem [shape: bf16[16,384], index: 5, kind: output, shape index: {}]
  %s6 = sld [smem:[#allocation0]]
  $region34: #{generate_lm_forward.11} parent=0
    _
  %s8 = ssub.s32 1, %s6
  %s9 = scalar_select 0, %s8, %s6
  // Predicated region
  $region2: #{generate_lm_forward.11} parent=0 // pred_check
    _
  $region3: #{generate_lm_forward.11} parent=0 // pred_check_branch
    %11 = sbr.rel (0) target = $region5
  $region4: #{generate_lm_forward.11} parent=0 // pred_region
    _
  $region5: #{generate_lm_forward.11} parent=0 // pred_fallthru
    _
  // Predicated region
  $region6: #{generate_lm_forward.11} parent=0 // pred_check
    _
  $region7: #{generate_lm_forward.11} parent=0 // pred_check_branch
    %13 = sbr.rel (0) target = $region9
  $region8: #{generate_lm_forward.11} parent=0 // pred_region
    _
  $region9: #{generate_lm_forward.11} parent=0 // pred_fallthru
    _
  // Predicated region
  $region10: #{generate_lm_forward.11} parent=0 // pred_check
    _
  $region11: #{generate_lm_forward.11} parent=0 // pred_check_branch
    %15 = sbr.rel (0) target = $region13
  $region12: #{generate_lm_forward.11} parent=0 // pred_region
    _
  $region13: #{generate_lm_forward.11} parent=0 // pred_fallthru
    _
  // Predicated region
  $region14: #{generate_lm_forward.11} parent=0 // pred_check
    _
  $region15: #{generate_lm_forward.11} parent=0 // pred_check_branch
    %17 = sbr.rel (0) target = $region17
  $region16: #{generate_lm_forward.11} parent=0 // pred_region
    _
  $region17: #{generate_lm_forward.11} parent=0 // pred_fallthru
    _
  // Predicated region
  $region18: #{generate_lm_forward.11} parent=0 // pred_check
    _
  $region19: #{generate_lm_forward.11} parent=0 // pred_check_branch
    %19 = sbr.rel (0) target = $region21
  $region20: #{generate_lm_forward.11} parent=0 // pred_region
    _
  $region21: #{generate_lm_forward.11} parent=0 // pred_fallthru
    _
  %p21 = scmp.eq.s32.totalorder 0, 0
  // Predicated region
  $region22: #{generate_lm_forward.11} parent=0 // pred_check
    %p22 = pneg %p21
  $region23: #{generate_lm_forward.11} parent=0 // pred_check_branch
    %24 = sbr.rel (%p22) target = $region25
  $region24: #{generate_lm_forward.11} parent=0 // pred_region
    %v25 = vld [vmem:[%s0] sm:$0xf]
    %v26 = vld [vmem:[%s0 + $0x4] sm:$0xf]
    %v27 = vld [vmem:[%s1] sm:$0x1]
    %v28 = vld [vmem:[%s2] sm:$0x1]
    %v29 = vunpack.c.l.bf16 %v25
    %v30 = vunpack.c.l.bf16 %v26
    %31 = vadd.xlane.f32.xlu0 %v29
    %v32 = vpop.xlane.xlu0 %31
    %33 = vadd.xlane.f32.xlu0 %v30
    %v34 = vpop.xlane.xlu0 %33
    %v35 = vrcp.pop 128.0
    %v36 = vmul.f32 %v32, %v35
    %v37 = vmul.f32 %v34, %v35
    %v38 = vsub.f32 %v29, %v36
    %v39 = vsub.f32 %v30, %v37
    %v40 = vmul.f32 %v38, %v38
    %v41 = vmul.f32 %v39, %v39
    %42 = vadd.xlane.f32.xlu0 %v40
    %v43 = vpop.xlane.xlu0 %42
    %44 = vadd.xlane.f32.xlu0 %v41
    %v45 = vpop.xlane.xlu0 %44
    %v46 = vmul.f32 %v43, %v35
    %v47 = vmul.f32 %v45, %v35
    %v48 = vadd.f32 %v46, 1e-06
    %v49 = vadd.f32 %v47, 1e-06
    %v50 = vrsqrt.pop %v48
    %v51 = vrsqrt.pop %v49
    %v52 = vmul.f32 %v38, %v50
    %v53 = vmul.f32 %v39, %v51
    %v55 = vlaneseq
    %v56 = vshrl.u32 %v55, 7
    %v57 = vsub.s32 0, %v56
    %v58 = vrot.slane %v27, %v57
    %v60 = vmul.f32 %v52, %v58
    %v61 = vmul.f32 %v53, %v58
    %v63 = vlaneseq
    %v64 = vshrl.u32 %v63, 7
    %v65 = vsub.s32 0, %v64
    %v66 = vrot.slane %v28, %v65
    %v68 = vadd.f32 %v60, %v66
    %v69 = vadd.f32 %v61, %v66
    %v70 = vpack.c.bf16 %v69, %v68
    %71 = vst [vmem:[#allocation2] sm:$0xff] %v70
  $region25: #{generate_lm_forward.11} parent=0 // pred_fallthru
    _
  %v72 = vld [vmem:[#allocation2] sm:$0xff]
  %v73 = vld [vmem:[%s3] sm:$0xff]
  %v74 = vld [vmem:[%s3 + $0x8] sm:$0xf]
  %v75 = vld [vmem:[%s3 + $0xc] sm:$0xff]
  %v76 = vld [vmem:[%s3 + $0x14] sm:$0xf]
  %v77 = vld [vmem:[%s3 + $0x18] sm:$0xff]
  %v78 = vld [vmem:[%s3 + $0x20] sm:$0xf]
  %v79 = vld [vmem:[%s3 + $0x24] sm:$0xff]
  %v80 = vld [vmem:[%s3 + $0x2c] sm:$0xf]
  %v81 = vld [vmem:[%s3 + $0x30] sm:$0xff]
  %v82 = vld [vmem:[%s3 + $0x38] sm:$0xf]
  %v83 = vld [vmem:[%s3 + $0x3c] sm:$0xff]
  %v84 = vld [vmem:[%s3 + $0x44] sm:$0xf]
  %v85 = vld [vmem:[%s3 + $0x48] sm:$0xff]
  %v86 = vld [vmem:[%s3 + $0x50] sm:$0xf]
  %v87 = vld [vmem:[%s3 + $0x54] sm:$0xff]
  %v88 = vld [vmem:[%s3 + $0x5c] sm:$0xf]
  %v89 = vld [vmem:[%s3 + $0x60] sm:$0xff]
  %v90 = vld [vmem:[%s3 + $0x68] sm:$0xf]
  %v91 = vld [vmem:[%s3 + $0x6c] sm:$0xff]
  %v92 = vld [vmem:[%s3 + $0x74] sm:$0xf]
  %v93 = vld [vmem:[%s3 + $0x78] sm:$0xff]
  %v94 = vld [vmem:[%s3 + $0x80] sm:$0xf]
  %v95 = vld [vmem:[%s3 + $0x84] sm:$0xff]
  %v96 = vld [vmem:[%s3 + $0x8c] sm:$0xf]
  %v97 = vld [vmem:[%s3 + $0x90] sm:$0xff]
  %v98 = vld [vmem:[%s3 + $0x98] sm:$0xf]
  %v99 = vld [vmem:[%s3 + $0x9c] sm:$0xff]
  %v100 = vld [vmem:[%s3 + $0xa4] sm:$0xf]
  %v101 = vld [vmem:[%s3 + $0xa8] sm:$0xff]
  %v102 = vld [vmem:[%s3 + $0xb0] sm:$0xf]
  %v103 = vld [vmem:[%s3 + $0xb4] sm:$0xff]
  %v104 = vld [vmem:[%s3 + $0xbc] sm:$0xf]
  %v105 = vld [vmem:[%s4] sm:$0x7]
  %v107 = vlaneseq
  %v108 = vshrl.u32 %v107, 7
  %v109 = vsub.s32 0, %v108
  %v110 = vrot.slane %v105, %v109
  %v111 = vlaneseq
  %v112 = vshrl.u32 %v111, 7
  %v113 = vsub.s32 1, %v112
  %v114 = vrot.slane %v105, %v113
  %v115 = vlaneseq
  %v116 = vshrl.u32 %v115, 7
  %v117 = vsub.s32 2, %v116
  %v118 = vrot.slane %v105, %v117
  %v154 = vunpack.c.l.b16 %v73
  %v155 = vunpack.c.h.b16 %v73
  %v156 = vunpack.c.l.b16 %v74
  %v157 = vunpack.c.l.b16 %v75
  %v158 = vunpack.c.h.b16 %v75
  %v159 = vunpack.c.l.b16 %v76
  %v160 = vunpack.c.l.b16 %v77
  %v161 = vunpack.c.h.b16 %v77
  %v162 = vunpack.c.l.b16 %v78
  %v163 = vunpack.c.l.b16 %v79
  %v164 = vunpack.c.h.b16 %v79
  %v165 = vunpack.c.l.b16 %v80
  %v166 = vunpack.c.l.b16 %v81
  %v167 = vunpack.c.h.b16 %v81
  %v168 = vunpack.c.l.b16 %v82
  %v169 = vunpack.c.l.b16 %v83
  %v170 = vunpack.c.h.b16 %v83
  %v171 = vunpack.c.l.b16 %v84
  %v172 = vunpack.c.l.b16 %v85
  %v173 = vunpack.c.h.b16 %v85
  %v174 = vunpack.c.l.b16 %v86
  %v175 = vunpack.c.l.b16 %v87
  %v176 = vunpack.c.h.b16 %v87
  %v177 = vunpack.c.l.b16 %v88
  %v178 = vunpack.c.l.b16 %v89
  %v179 = vunpack.c.h.b16 %v89
  %v180 = vunpack.c.l.b16 %v90
  %v181 = vunpack.c.l.b16 %v91
  %v182 = vunpack.c.h.b16 %v91
  %v183 = vunpack.c.l.b16 %v92
  %v184 = vunpack.c.l.b16 %v93
  %v185 = vunpack.c.h.b16 %v93
  %v186 = vunpack.c.l.b16 %v94
  %v187 = vunpack.c.l.b16 %v95
  %v188 = vunpack.c.h.b16 %v95
  %v189 = vunpack.c.l.b16 %v96
  %v190 = vunpack.c.l.b16 %v97
  %v191 = vunpack.c.h.b16 %v97
  %v192 = vunpack.c.l.b16 %v98
  %v193 = vunpack.c.l.b16 %v99
  %v194 = vunpack.c.h.b16 %v99
  %v195 = vunpack.c.l.b16 %v100
  %v196 = vunpack.c.l.b16 %v101
  %v197 = vunpack.c.h.b16 %v101
  %v198 = vunpack.c.l.b16 %v102
  %v199 = vunpack.c.l.b16 %v103
  %v200 = vunpack.c.h.b16 %v103
  %v201 = vunpack.c.l.b16 %v104
  %v202 = vpack.c.b16 %v157, %v154
  %v203 = vpack.c.b16 %v158, %v155
  %v204 = vpack.c.b16 %v159, %v156
  %v205 = vpack.c.b16 %v163, %v160
  %v206 = vpack.c.b16 %v164, %v161
  %v207 = vpack.c.b16 %v165, %v162
  %v208 = vpack.c.b16 %v169, %v166
  %v209 = vpack.c.b16 %v170, %v167
  %v210 = vpack.c.b16 %v171, %v168
  %v211 = vpack.c.b16 %v175, %v172
  %v212 = vpack.c.b16 %v176, %v173
  %v213 = vpack.c.b16 %v177, %v174
  %v214 = vpack.c.b16 %v181, %v178
  %v215 = vpack.c.b16 %v182, %v179
  %v216 = vpack.c.b16 %v183, %v180
  %v217 = vpack.c.b16 %v187, %v184
  %v218 = vpack.c.b16 %v188, %v185
  %v219 = vpack.c.b16 %v189, %v186
  %v220 = vpack.c.b16 %v193, %v190
  %v221 = vpack.c.b16 %v194, %v191
  %v222 = vpack.c.b16 %v195, %v192
  %v223 = vpack.c.b16 %v199, %v196
  %v224 = vpack.c.b16 %v200, %v197
  %v225 = vpack.c.b16 %v201, %v198
  %250 = vmatprep.subr.bf16.mxu0 %v203
  %251 = vmatpush1.bf16.msra.mxu0 %v202
  %252 = vmatprep.subr.bf16.mxu0 %v206
  %253 = vmatpush1.bf16.msra.mxu0 %v205
  %254 = vmatprep.subr.bf16.mxu0 %v209
  %255 = vmatpush1.bf16.msra.mxu0 %v208
  %256 = vmatprep.subr.bf16.mxu0 %v212
  %257 = vmatpush1.bf16.msra.mxu0 %v211
  %258 = vmatprep.subr.bf16.mxu0 %v215
  %259 = vmatpush1.bf16.msra.mxu0 %v214
  %260 = vmatprep.subr.bf16.mxu0 %v218
  %261 = vmatpush1.bf16.msra.mxu0 %v217
  %262 = vmatprep.subr.bf16.mxu0 %v221
  %263 = vmatpush1.bf16.msra.mxu0 %v220
  %264 = vmatprep.subr.bf16.mxu0 %v224
  %265 = vmatpush1.bf16.msra.mxu0 %v223
  %266 = vmatprep.subr.bf16.mxu0 0
  %267 = vmatpush1.bf16.msra.mxu0 0
  %268 = vmatprep.subr.bf16.mxu0 0
  %269 = vmatpush1.bf16.msra.mxu0 0
  %270 = vmatprep.subr.bf16.mxu0 0
  %271 = vmatpush1.bf16.msra.mxu0 0
  %272 = vmatprep.subr.bf16.mxu0 0
  %273 = vmatpush1.bf16.msra.mxu0 0
  %274 = vmatprep.subr.bf16.mxu0 0
  %275 = vmatpush1.bf16.msra.mxu0 0
  %276 = vmatprep.subr.bf16.mxu0 0
  %277 = vmatpush1.bf16.msra.mxu0 0
  %278 = vmatprep.subr.bf16.mxu0 0
  %279 = vmatpush1.bf16.msra.mxu0 0
  %280 = vmatprep.subr.bf16.mxu0 0
  %281 = vmatpush1.bf16.msra.mxu0 0
  %282 = vmatprep.mubr.bf16.mxu0 0
  %283 = vmatmul.mubr.bf16.gmra.mrb[0].mxu0 %v72
  %v284 = vpop.f32.mrb[0].mxu0
  %v285 = vadd.f32 %v110, %v284
  %v286 = vpop.f32.mrb[0].mxu0
  %v287 = vadd.f32 %v114, %v286
  %v288 = vpop.f32.mrb[0].mxu0
  %v289 = vadd.f32 %v110, %v288
  %v290 = vpop.f32.mrb[0].mxu0
  %v291 = vadd.f32 %v114, %v290
  %292 = vdwg.mxu0
  %293 = vmatprep.subr.bf16.mxu0 0
  %294 = vmatpush1.bf16.msra.mxu0 %v204
  %295 = vmatprep.subr.bf16.mxu0 0
  %296 = vmatpush1.bf16.msra.mxu0 %v207
  %297 = vmatprep.subr.bf16.mxu0 0
  %298 = vmatpush1.bf16.msra.mxu0 %v210
  %299 = vmatprep.subr.bf16.mxu0 0
  %300 = vmatpush1.bf16.msra.mxu0 %v213
  %301 = vmatprep.subr.bf16.mxu0 0
  %302 = vmatpush1.bf16.msra.mxu0 %v216
  %303 = vmatprep.subr.bf16.mxu0 0
  %304 = vmatpush1.bf16.msra.mxu0 %v219
  %305 = vmatprep.subr.bf16.mxu0 0
  %306 = vmatpush1.bf16.msra.mxu0 %v222
  %307 = vmatprep.subr.bf16.mxu0 0
  %308 = vmatpush1.bf16.msra.mxu0 %v225
  %309 = vmatprep.subr.bf16.mxu0 0
  %310 = vmatpush1.bf16.msra.mxu0 0
  %311 = vmatprep.subr.bf16.mxu0 0
  %312 = vmatpush1.bf16.msra.mxu0 0
  %313 = vmatprep.subr.bf16.mxu0 0
  %314 = vmatpush1.bf16.msra.mxu0 0
  %315 = vmatprep.subr.bf16.mxu0 0
  %316 = vmatpush1.bf16.msra.mxu0 0
  %317 = vmatprep.subr.bf16.mxu0 0
  %318 = vmatpush1.bf16.msra.mxu0 0
  %319 = vmatprep.subr.bf16.mxu0 0
  %320 = vmatpush1.bf16.msra.mxu0 0
  %321 = vmatprep.subr.bf16.mxu0 0
  %322 = vmatpush1.bf16.msra.mxu0 0
  %323 = vmatprep.subr.bf16.mxu0 0
  %324 = vmatpush1.bf16.msra.mxu0 0
  %325 = vmatprep.mubr.bf16.mxu0 0
  %326 = vmatmul.mubr.bf16.gmra.mrb[0].mxu0 %v72
  %v327 = vpop.f32.mrb[0].mxu0
  %v328 = vadd.f32 %v118, %v327
  %v329 = vpop.f32.mrb[0].mxu0
  %v330 = vpop.f32.mrb[0].mxu0
  %v331 = vadd.f32 %v118, %v330
  %v332 = vpop.f32.mrb[0].mxu0
  %333 = vdwg.mxu0
  %v334 = vpack.c.bf16 %v289, %v285
  %v335 = vpack.c.bf16 %v291, %v287
  %v336 = vpack.c.bf16 %v331, %v328
  %v340 = vunpack.c.l.b16 %v334
  %v341 = vunpack.c.l.b16 %v335
  %v342 = vunpack.c.l.b16 %v336
  %v343 = vunpack.c.h.b16 %v334
  %v344 = vunpack.c.h.b16 %v335
  %v345 = vunpack.c.h.b16 %v336
  %v346 = vpack.c.b16 %v341, %v340
  %v347 = vpack.c.b16 %v342, %v342
  %v348 = vpack.c.b16 %v344, %v343
  %v349 = vpack.c.b16 %v345, %v345
  %354 = vst [vmem:[%s5] sm:$0xff] %v346
  %355 = vst [vmem:[%s5 + $0x8] sm:$0xf] %v347
  %356 = vst [vmem:[%s5 + $0xc] sm:$0xff] %v348
  %357 = vst [vmem:[%s5 + $0x14] sm:$0xf] %v349
  // Predicated region
  $region26: #{generate_lm_forward.11} parent=0 // pred_check
    _
  $region27: #{generate_lm_forward.11} parent=0 // pred_check_branch
    %359 = sbr.rel (0) target = $region29
  $region28: #{generate_lm_forward.11} parent=0 // pred_region
    _
  $region29: #{generate_lm_forward.11} parent=0 // pred_fallthru
    _
  // Predicated region
  $region30: #{generate_lm_forward.11} parent=0 // pred_check
    _
  $region31: #{generate_lm_forward.11} parent=0 // pred_check_branch
    %361 = sbr.rel (0) target = $region33
  $region32: #{generate_lm_forward.11} parent=0 // pred_region
    _
  $region33: #{generate_lm_forward.11} parent=0 // pred_fallthru
    _

// kernel: generate_lm_forward.12
$region0: #{generate_lm_forward.12}
  #allocation0 [shape = 'u32[]', space=smem, size = 0x4, offset = 0x4, fixed_abs, tag = 'smem constant byte address 0x4 - core index']
  #allocation1 [shape = 'u32[144,128]{1,0:T(1,128)}', space=vmem, size = 0x12000, scoped, tag = 'internal scratch']
  %s0 = inlined_call_operand.vmem [shape: bf16[2,2,8,64], index: 0, kind: input, shape index: {}]
  %s1 = inlined_call_operand.vmem [shape: bf16[2,2,8,64], index: 1, kind: input, shape index: {}]
  %s2 = inlined_call_operand.vmem [shape: bf16[2,2,8,64], index: 2, kind: input, shape index: {}]
  %s3 = inlined_call_operand.vmem [shape: s32[2,1,8], index: 3, kind: input, shape index: {}]
  %s4 = inlined_call_operand.vmem [shape: bf16[2,2,8,64], index: 4, kind: output, shape index: {}]
  %s5 = sld [smem:[#allocation0]]
  $region49: #{generate_lm_forward.12} parent=0
    _
  %s7 = ssub.s32 1, %s5
  %s8 = scalar_select 0, %s7, %s5
  loop: start=0, step=1, limit=4
  $region2: #{generate_lm_forward.12} parent=0 // loop_pre_header
    _
  $region3: #{generate_lm_forward.12} parent=0 // loop_header
    %s10 = sphi 0, %s14
    %p11 = scmp.ge.s32.totalorder %s10, 4
    %s20 = sphi 0, %s22
    %s23 = sphi 0, %s20
    %s24 = sphi 0, %s23
    %s40 = sphi 0, %s24
    %s46 = sphi 0, %s48
    %s49 = sphi 0, %s46
    %s50 = sphi 0, %s49
    %s66 = sphi 0, %s50
    %s72 = sphi 0, %s74
    %s75 = sphi 0, %s72
    %s76 = sphi 0, %s75
    %s92 = sphi 0, %s76
    %s98 = sphi 0, %s100
    %s101 = sphi 0, %s98
    %s102 = sphi 0, %s101
    %s118 = sphi 0, %s102
    %s124 = sphi 0, %s126
    %s127 = sphi 0, %s124
    %s128 = sphi 0, %s127
    %s144 = sphi 0, %s128
  $region4: #{generate_lm_forward.12} parent=0 // loop_header_branch
    %13 = sbr.rel (%p11) target = $region8
  $region5: #{generate_lm_forward.12} parent=0 // loop_body
    %s15 = ssub.s32 %s10, 1
    %s16 = ssub.s32 %s10, 2
    %s17 = sadd.s32 %s10, 1
    %s18 = ssub.s32 %s10, %s17
    %p19 = scmp.eq.s32.totalorder %s18, 0
    %s21 = sadd.s32 %s20, 1
    %s22 = scalar_select %p19, %s20, %s21
    %p25 = pneg %p19
    %p26 = scmp.eq.s32.totalorder %s10, 1
    %p27 = por %p25, %p26
    %p28 = scmp.ne.s32.totalorder %s20, %s23
    %p29 = scmp.eq.s32.totalorder %s10, 0
    %p30 = por %p28, %p29
    %p31 = scmp.ne.s32.totalorder %s20, %s23
    %p32 = scmp.eq.s32.totalorder %s15, 1
    %p33 = por %p31, %p32
    %p34 = scmp.ne.s32.totalorder %s23, %s24
    %p35 = scmp.eq.s32.totalorder %s15, 0
    %p36 = por %p34, %p35
    %p37 = scmp.ne.s32.totalorder %s23, %s24
    %p38 = scmp.eq.s32.totalorder %s16, 1
    %p39 = por %p37, %p38
    %p41 = scmp.ne.s32.totalorder %s24, %s40
    %p42 = scmp.eq.s32.totalorder %s16, 0
    %p43 = por %p41, %p42
    %s44 = ssub.s32 %s10, %s17
    %p45 = scmp.eq.s32.totalorder %s44, 0
    %s47 = sadd.s32 %s46, 1
    %s48 = scalar_select %p45, %s46, %s47
    %p51 = pneg %p45
    %p52 = scmp.eq.s32.totalorder %s10, 1
    %p53 = por %p51, %p52
    %p54 = scmp.ne.s32.totalorder %s46, %s49
    %p55 = scmp.eq.s32.totalorder %s10, 0
    %p56 = por %p54, %p55
    %p57 = scmp.ne.s32.totalorder %s46, %s49
    %p58 = scmp.eq.s32.totalorder %s15, 1
    %p59 = por %p57, %p58
    %p60 = scmp.ne.s32.totalorder %s49, %s50
    %p61 = scmp.eq.s32.totalorder %s15, 0
    %p62 = por %p60, %p61
    %p63 = scmp.ne.s32.totalorder %s49, %s50
    %p64 = scmp.eq.s32.totalorder %s16, 1
    %p65 = por %p63, %p64
    %p67 = scmp.ne.s32.totalorder %s50, %s66
    %p68 = scmp.eq.s32.totalorder %s16, 0
    %p69 = por %p67, %p68
    %s70 = ssub.s32 %s10, %s17
    %p71 = scmp.eq.s32.totalorder %s70, 0
    %s73 = sadd.s32 %s72, 1
    %s74 = scalar_select %p71, %s72, %s73
    %p77 = pneg %p71
    %p78 = scmp.eq.s32.totalorder %s10, 1
    %p79 = por %p77, %p78
    %p80 = scmp.ne.s32.totalorder %s72, %s75
    %p81 = scmp.eq.s32.totalorder %s10, 0
    %p82 = por %p80, %p81
    %p83 = scmp.ne.s32.totalorder %s72, %s75
    %p84 = scmp.eq.s32.totalorder %s15, 1
    %p85 = por %p83, %p84
    %p86 = scmp.ne.s32.totalorder %s75, %s76
    %p87 = scmp.eq.s32.totalorder %s15, 0
    %p88 = por %p86, %p87
    %p89 = scmp.ne.s32.totalorder %s75, %s76
    %p90 = scmp.eq.s32.totalorder %s16, 1
    %p91 = por %p89, %p90
    %p93 = scmp.ne.s32.totalorder %s76, %s92
    %p94 = scmp.eq.s32.totalorder %s16, 0
    %p95 = por %p93, %p94
    %s96 = ssub.s32 %s10, %s17
    %p97 = scmp.eq.s32.totalorder %s96, 0
    %s99 = sadd.s32 %s98, 1
    %s100 = scalar_select %p97, %s98, %s99
    %p103 = pneg %p97
    %p104 = scmp.eq.s32.totalorder %s10, 1
    %p105 = por %p103, %p104
    %p106 = scmp.ne.s32.totalorder %s98, %s101
    %p107 = scmp.eq.s32.totalorder %s10, 0
    %p108 = por %p106, %p107
    %p109 = scmp.ne.s32.totalorder %s98, %s101
    %p110 = scmp.eq.s32.totalorder %s15, 1
    %p111 = por %p109, %p110
    %p112 = scmp.ne.s32.totalorder %s101, %s102
    %p113 = scmp.eq.s32.totalorder %s15, 0
    %p114 = por %p112, %p113
    %p115 = scmp.ne.s32.totalorder %s101, %s102
    %p116 = scmp.eq.s32.totalorder %s16, 1
    %p117 = por %p115, %p116
    %p119 = scmp.ne.s32.totalorder %s102, %s118
    %p120 = scmp.eq.s32.totalorder %s16, 0
    %p121 = por %p119, %p120
    %s122 = ssub.s32 %s10, %s17
    %p123 = scmp.eq.s32.totalorder %s122, 0
    %s125 = sadd.s32 %s124, 1
    %s126 = scalar_select %p123, %s124, %s125
    %p129 = pneg %p123
    %p130 = scmp.eq.s32.totalorder %s10, 1
    %p131 = por %p129, %p130
    %p132 = scmp.ne.s32.totalorder %s124, %s127
    %p133 = scmp.eq.s32.totalorder %s10, 0
    %p134 = por %p132, %p133
    %p135 = scmp.ne.s32.totalorder %s124, %s127
    %p136 = scmp.eq.s32.totalorder %s15, 1
    %p137 = por %p135, %p136
    %p138 = scmp.ne.s32.totalorder %s127, %s128
    %p139 = scmp.eq.s32.totalorder %s15, 0
    %p140 = por %p138, %p139
    %p141 = scmp.ne.s32.totalorder %s127, %s128
    %p142 = scmp.eq.s32.totalorder %s16, 1
    %p143 = por %p141, %p142
    %p145 = scmp.ne.s32.totalorder %s128, %s144
    %p146 = scmp.eq.s32.totalorder %s16, 0
    %p147 = por %p145, %p146
    %p148 = scmp.le.s32.totalorder 1, %s10
    %p149 = scmp.lt.s32.totalorder %s10, 3
    %p150 = pnand %p148, %p149
    %p151 = pneg %p150
    // Predicated region
    $region9: #{generate_lm_forward.12} parent=5 // pred_check
      _
    $region10: #{generate_lm_forward.12} parent=5 // pred_check_branch
      %153 = sbr.rel (%p150) target = $region12
    $region11: #{generate_lm_forward.12} parent=5 // pred_region
      %s154 = ssub.s32 %s10, 1
    $region12: #{generate_lm_forward.12} parent=5 // pred_fallthru
      _
    %p155 = scmp.lt.s32.totalorder %s10, 2
    // Predicated region
    $region13: #{generate_lm_forward.12} parent=5 // pred_check
      %p156 = pneg %p155
    $region14: #{generate_lm_forward.12} parent=5 // pred_check_branch
      %158 = sbr.rel (%p156) target = $region16
    $region15: #{generate_lm_forward.12} parent=5 // pred_region
      // Predicated region
      $region17: #{generate_lm_forward.12} parent=15 // pred_check
        %p159 = pneg %p30
      $region18: #{generate_lm_forward.12} parent=15 // pred_check_branch
        %161 = sbr.rel (%p159) target = $region20
      $region19: #{generate_lm_forward.12} parent=15 // pred_region
        %p162 = scmp.lt.s32.totalorder %s10, 1
        %s163 = scalar_select %p162, %s10, 1
        %s164 = smul.addr %s163, 2
        %s165 = smul.addr %s164, 4
        %s166 = scalar_lea.vmem %s0, %s165
      $region20: #{generate_lm_forward.12} parent=15 // pred_fallthru
        _
      // Predicated region
      $region21: #{generate_lm_forward.12} parent=15 // pred_check
        %p167 = pneg %p56
      $region22: #{generate_lm_forward.12} parent=15 // pred_check_branch
        %169 = sbr.rel (%p167) target = $region24
      $region23: #{generate_lm_forward.12} parent=15 // pred_region
        %p170 = scmp.lt.s32.totalorder %s10, 1
        %s171 = scalar_select %p170, %s10, 1
        %s172 = smul.addr %s171, 2
        %s173 = smul.addr %s172, 4
        %s174 = scalar_lea.vmem %s1, %s173
      $region24: #{generate_lm_forward.12} parent=15 // pred_fallthru
        _
      // Predicated region
      $region25: #{generate_lm_forward.12} parent=15 // pred_check
        %p175 = pneg %p82
      $region26: #{generate_lm_forward.12} parent=15 // pred_check_branch
        %177 = sbr.rel (%p175) target = $region28
      $region27: #{generate_lm_forward.12} parent=15 // pred_region
        %p178 = scmp.lt.s32.totalorder %s10, 1
        %s179 = scalar_select %p178, %s10, 1
        %s180 = smul.addr %s179, 2
        %s181 = smul.addr %s180, 4
        %s182 = scalar_lea.vmem %s2, %s181
      $region28: #{generate_lm_forward.12} parent=15 // pred_fallthru
        _
      // Predicated region
      $region29: #{generate_lm_forward.12} parent=15 // pred_check
        %p183 = pneg %p108
      $region30: #{generate_lm_forward.12} parent=15 // pred_check_branch
        %185 = sbr.rel (%p183) target = $region32
      $region31: #{generate_lm_forward.12} parent=15 // pred_region
        %p186 = scmp.lt.s32.totalorder %s10, 1
        %s187 = scalar_select %p186, %s10, 1
        %s188 = scalar_lea.vmem %s3, %s187
      $region32: #{generate_lm_forward.12} parent=15 // pred_fallthru
        _
    $region16: #{generate_lm_forward.12} parent=5 // pred_fallthru
      _
    %p189 = scmp.le.s32.totalorder 1, %s10
    %p190 = scmp.lt.s32.totalorder %s10, 3
    %p191 = pnand %p189, %p190
    %p192 = pneg %p191
    // Predicated region
    $region33: #{generate_lm_forward.12} parent=5 // pred_check
      _
    $region34: #{generate_lm_forward.12} parent=5 // pred_check_branch
      %194 = sbr.rel (%p191) target = $region36
    $region35: #{generate_lm_forward.12} parent=5 // pred_region
      %s195 = ssub.s32 %s10, 1
      %p196 = scmp.lt.s32.totalorder %s15, 1
      %s197 = scalar_select %p196, %s15, 1
      %s198 = smul.addr %s197, 2
      %s199 = smul.addr %s198, 4
      %s200 = scalar_lea.vmem %s0, %s199
      %p201 = pneg %p36
      %p202 = pneg %p33
      %p203 = scmp.lt.s32.totalorder %s15, 1
      %s204 = scalar_select %p203, %s15, 1
      %s205 = smul.addr %s204, 2
      %s206 = smul.addr %s205, 4
      %s207 = scalar_lea.vmem %s1, %s206
      %p208 = pneg %p62
      %p209 = pneg %p59
      %p210 = scmp.lt.s32.totalorder %s15, 1
      %s211 = scalar_select %p210, %s15, 1
      %s212 = smul.addr %s211, 2
      %s213 = smul.addr %s212, 4
      %s214 = scalar_lea.vmem %s2, %s213
      %p215 = pneg %p88
      %p216 = pneg %p85
      %p217 = scmp.lt.s32.totalorder %s15, 1
      %s218 = scalar_select %p217, %s15, 1
      %s219 = scalar_lea.vmem %s3, %s218
      %p220 = pneg %p114
      %p221 = pneg %p111
      %p222 = pneg %p140
      %p223 = pneg %p137
      %p224 = scmp.lt.s32.totalorder %s15, 1
      %s225 = scalar_select %p224, %s15, 1
      %s226 = smul.addr %s225, 2
      %s227 = smul.addr %s226, 4
      %s228 = scalar_lea.vmem %s4, %s227
      %p229 = scmp.lt.s32.totalorder %s15, 1
      %s230 = scalar_select %p229, %s15, 1
      %s231 = smul.addr %s230, 2
      %s232 = smul.addr %s231, 4
      %s233 = scalar_lea.vmem %s0, %s232
      %p234 = scmp.lt.s32.totalorder %s15, 1
      %s235 = scalar_select %p234, %s15, 1
      %s236 = smul.addr %s235, 2
      %s237 = smul.addr %s236, 4
      %s238 = scalar_lea.vmem %s1, %s237
      %p239 = scmp.lt.s32.totalorder %s15, 1
      %s240 = scalar_select %p239, %s15, 1
      %s241 = smul.addr %s240, 2
      %s242 = smul.addr %s241, 4
      %s243 = scalar_lea.vmem %s2, %s242
      %p244 = scmp.lt.s32.totalorder %s15, 1
      %s245 = scalar_select %p244, %s15, 1
      %s246 = scalar_lea.vmem %s3, %s245
      %p247 = scmp.lt.s32.totalorder %s15, 1
      %s248 = scalar_select %p247, %s15, 1
      %s249 = smul.addr %s248, 2
      %s250 = smul.addr %s249, 4
      %s251 = scalar_lea.vmem %s4, %s250
      %v253 = vld [vmem:[%s233] sm:$0xf]
      %v254 = vld [vmem:[%s233 + $0x4] sm:$0xf]
      %v255 = vunpack.c.l.bf16 %v253
      %v256 = vunpack.c.l.bf16 %v254
      %v257 = vmul.f32 %v255, 0.125
      %v258 = vmul.f32 %v256, 0.125
      %v259 = vpack.c.bf16 %v257, %v257
      %v260 = vpack.c.bf16 %v258, %v258
      %v261 = vld [vmem:[%s238] sm:$0xf]
      %v262 = vld [vmem:[%s238 + $0x4] sm:$0xf]
      %v263 = vld [vmem:[%s243] sm:$0xf]
      %v264 = vld [vmem:[%s243 + $0x4] sm:$0xf]
      %vm265 = vcmask 523264
      %v267 = vsel %vm265, %v259, 0
      %v270 = vsel %vm265, %v261, 0
      %272 = vmatprep.subr.bf16.mxu0 0
      %273 = vmatpush1.bf16.xpose.msra.mxu0 %v270
      %274 = vmatprep.subr.bf16.mxu0 0
      %275 = vmatpush1.bf16.xpose.msra.mxu0 0
      %276 = vmatprep.subr.bf16.mxu0 0
      %277 = vmatpush1.bf16.xpose.msra.mxu0 0
      %278 = vmatprep.subr.bf16.mxu0 0
      %279 = vmatpush1.bf16.xpose.msra.mxu0 0
      %280 = vmatprep.subr.bf16.mxu0 0
      %281 = vmatpush1.bf16.xpose.msra.mxu0 0
      %282 = vmatprep.subr.bf16.mxu0 0
      %283 = vmatpush1.bf16.xpose.msra.mxu0 0
      %284 = vmatprep.subr.bf16.mxu0 0
      %285 = vmatpush1.bf16.xpose.msra.mxu0 0
      %286 = vmatprep.subr.bf16.mxu0 0
      %287 = vmatpush1.bf16.xpose.msra.mxu0 0
      %288 = vmatprep.subr.bf16.mxu0 0
      %289 = vmatpush1.bf16.xpose.msra.mxu0 0
      %290 = vmatprep.subr.bf16.mxu0 0
      %291 = vmatpush1.bf16.xpose.msra.mxu0 0
      %292 = vmatprep.subr.bf16.mxu0 0
      %293 = vmatpush1.bf16.xpose.msra.mxu0 0
      %294 = vmatprep.subr.bf16.mxu0 0
      %295 = vmatpush1.bf16.xpose.msra.mxu0 0
      %296 = vmatprep.subr.bf16.mxu0 0
      %297 = vmatpush1.bf16.xpose.msra.mxu0 0
      %298 = vmatprep.subr.bf16.mxu0 0
      %299 = vmatpush1.bf16.xpose.msra.mxu0 0
      %300 = vmatprep.subr.bf16.mxu0 0
      %301 = vmatpush1.bf16.xpose.msra.mxu0 0
      %302 = vmatprep.subr.bf16.mxu0 0
      %303 = vmatpush1.bf16.xpose.msra.mxu0 0
      %304 = vmatprep.mubr.bf16.mxu0 0
      %305 = vmatmul.mubr.bf16.gmra.mrb[0].mxu0 %v267
      %v306 = vpop.f32.mrb[0].mxu0
      %v307 = vadd.f32 0.0, %v306
      %v308 = vpop.f32.mrb[0].mxu0
      %v309 = vpop.f32.mrb[0].mxu0
      %v310 = vpop.f32.mrb[0].mxu0
      %311 = vdwg.mxu0
      %v313 = vsel %vm265, %v260, 0
      %v316 = vsel %vm265, %v262, 0
      %318 = vmatprep.subr.bf16.mxu0 0
      %319 = vmatpush1.bf16.xpose.msra.mxu0 %v316
      %320 = vmatprep.subr.bf16.mxu0 0
      %321 = vmatpush1.bf16.xpose.msra.mxu0 0
      %322 = vmatprep.subr.bf16.mxu0 0
      %323 = vmatpush1.bf16.xpose.msra.mxu0 0
      %324 = vmatprep.subr.bf16.mxu0 0
      %325 = vmatpush1.bf16.xpose.msra.mxu0 0
      %326 = vmatprep.subr.bf16.mxu0 0
      %327 = vmatpush1.bf16.xpose.msra.mxu0 0
      %328 = vmatprep.subr.bf16.mxu0 0
      %329 = vmatpush1.bf16.xpose.msra.mxu0 0
      %330 = vmatprep.subr.bf16.mxu0 0
      %331 = vmatpush1.bf16.xpose.msra.mxu0 0
      %332 = vmatprep.subr.bf16.mxu0 0
      %333 = vmatpush1.bf16.xpose.msra.mxu0 0
      %334 = vmatprep.subr.bf16.mxu0 0
      %335 = vmatpush1.bf16.xpose.msra.mxu0 0
      %336 = vmatprep.subr.bf16.mxu0 0
      %337 = vmatpush1.bf16.xpose.msra.mxu0 0
      %338 = vmatprep.subr.bf16.mxu0 0
      %339 = vmatpush1.bf16.xpose.msra.mxu0 0
      %340 = vmatprep.subr.bf16.mxu0 0
      %341 = vmatpush1.bf16.xpose.msra.mxu0 0
      %342 = vmatprep.subr.bf16.mxu0 0
      %343 = vmatpush1.bf16.xpose.msra.mxu0 0
      %344 = vmatprep.subr.bf16.mxu0 0
      %345 = vmatpush1.bf16.xpose.msra.mxu0 0
      %346 = vmatprep.subr.bf16.mxu0 0
      %347 = vmatpush1.bf16.xpose.msra.mxu0 0
      %348 = vmatprep.subr.bf16.mxu0 0
      %349 = vmatpush1.bf16.xpose.msra.mxu0 0
      %350 = vmatprep.mubr.bf16.mxu0 0
      %351 = vmatmul.mubr.bf16.gmra.mrb[0].mxu0 %v313
      %v352 = vpop.f32.mrb[0].mxu0
      %v353 = vadd.f32 0.0, %v352
      %v354 = vpop.f32.mrb[0].mxu0
      %v355 = vpop.f32.mrb[0].mxu0
      %v356 = vpop.f32.mrb[0].mxu0
      %357 = vdwg.mxu0
      %v358 = vlaneseq
      %v359 = vshrl.u32 %v358, 7
      %v360 = vlaneseq
      %v361 = vand.u32 %v360, 127
      %v362 = vld [vmem:[%s246] sm:$0x1]
      %vm363 = vcmp.gt.s32.totalorder %v362, 0
      %vm364 = vcmp.le.s32.totalorder %v361, %v359
      %v365 = vsel %vm363, 1, 0
      %v366 = vlaneseq
      %v367 = vshrl.u32 %v366, 7
      %v368 = vsub.s32 0, %v367
      %v369 = vrot.slane %v365, %v368
      %vm370 = vcmp.eq.s32.totalorder %v369, 1
      %vm371 = vmand %vm364, %vm370
      %v372 = vsel %vm371, 1, 0
      %vm373 = vcmp.eq.s32.totalorder %v372, 1
      %v374 = vsel %vm373, %v307, -1e+09
      %v375 = vsel %vm373, %v353, -1e+09
      %vm376 = vcmask 64512
      %v377 = vsel %vm376, %v374, -inf
      %378 = vmax.xlane.f32.xlu0 %v377
      %v379 = vpop.xlane.xlu0 %378
      %v380 = vsel %vm376, %v375, -inf
      %381 = vmax.xlane.f32.xlu0 %v380
      %v382 = vpop.xlane.xlu0 %381
      %v383 = vsub.f32 %v374, %v379
      %v384 = vsub.f32 %v375, %v382
      %v385 = vmul.f32 %v383, 1.442695
      %v386 = vpow.pop %v385
      %v387 = vmul.f32 %v384, 1.442695
      %v388 = vpow.pop %v387
      %v389 = vsel %vm376, %v386, 0.0
      %390 = vadd.xlane.f32.xlu0 %v389
      %v391 = vpop.xlane.xlu0 %390
      %v392 = vsel %vm376, %v388, 0.0
      %393 = vadd.xlane.f32.xlu0 %v392
      %v394 = vpop.xlane.xlu0 %393
      %v395 = vrcp.pop %v391
      %v396 = vrcp.pop %v394
      %v397 = vmul.f32 %v386, %v395
      %v398 = vmul.f32 %v388, %v396
      %v399 = vpack.c.bf16 %v397, %v397
      %v400 = vpack.c.bf16 %v398, %v398
      %v402 = vsel %vm376, %v399, 0
      %vm404 = vcmask 1043456
      %v406 = vsel %vm404, %v263, 0
      %408 = vmatprep.subr.bf16.mxu0 0
      %409 = vmatpush1.bf16.msra.mxu0 %v406
      %410 = vmatprep.subr.bf16.mxu0 0
      %411 = vmatpush1.bf16.msra.mxu0 0
      %412 = vmatprep.subr.bf16.mxu0 0
      %413 = vmatpush1.bf16.msra.mxu0 0
      %414 = vmatprep.subr.bf16.mxu0 0
      %415 = vmatpush1.bf16.msra.mxu0 0
      %416 = vmatprep.subr.bf16.mxu0 0
      %417 = vmatpush1.bf16.msra.mxu0 0
      %418 = vmatprep.subr.bf16.mxu0 0
      %419 = vmatpush1.bf16.msra.mxu0 0
      %420 = vmatprep.subr.bf16.mxu0 0
      %421 = vmatpush1.bf16.msra.mxu0 0
      %422 = vmatprep.subr.bf16.mxu0 0
      %423 = vmatpush1.bf16.msra.mxu0 0
      %424 = vmatprep.subr.bf16.mxu0 0
      %425 = vmatpush1.bf16.msra.mxu0 0
      %426 = vmatprep.subr.bf16.mxu0 0
      %427 = vmatpush1.bf16.msra.mxu0 0
      %428 = vmatprep.subr.bf16.mxu0 0
      %429 = vmatpush1.bf16.msra.mxu0 0
      %430 = vmatprep.subr.bf16.mxu0 0
      %431 = vmatpush1.bf16.msra.mxu0 0
      %432 = vmatprep.subr.bf16.mxu0 0
      %433 = vmatpush1.bf16.msra.mxu0 0
      %434 = vmatprep.subr.bf16.mxu0 0
      %435 = vmatpush1.bf16.msra.mxu0 0
      %436 = vmatprep.subr.bf16.mxu0 0
      %437 = vmatpush1.bf16.msra.mxu0 0
      %438 = vmatprep.subr.bf16.mxu0 0
      %439 = vmatpush1.bf16.msra.mxu0 0
      %440 = vmatprep.mubr.bf16.mxu0 0
      %441 = vmatmul.mubr.bf16.gmra.mrb[0].mxu0 %v402
      %v442 = vpop.f32.mrb[0].mxu0
      %v443 = vadd.f32 0.0, %v442
      %v444 = vpop.f32.mrb[0].mxu0
      %v445 = vpop.f32.mrb[0].mxu0
      %v446 = vpop.f32.mrb[0].mxu0
      %447 = vdwg.mxu0
      %v449 = vsel %vm376, %v400, 0
      %v452 = vsel %vm404, %v264, 0
      %454 = vmatprep.subr.bf16.mxu0 0
      %455 = vmatpush1.bf16.msra.mxu0 %v452
      %456 = vmatprep.subr.bf16.mxu0 0
      %457 = vmatpush1.bf16.msra.mxu0 0
      %458 = vmatprep.subr.bf16.mxu0 0
      %459 = vmatpush1.bf16.msra.mxu0 0
      %460 = vmatprep.subr.bf16.mxu0 0
      %461 = vmatpush1.bf16.msra.mxu0 0
      %462 = vmatprep.subr.bf16.mxu0 0
      %463 = vmatpush1.bf16.msra.mxu0 0
      %464 = vmatprep.subr.bf16.mxu0 0
      %465 = vmatpush1.bf16.msra.mxu0 0
      %466 = vmatprep.subr.bf16.mxu0 0
      %467 = vmatpush1.bf16.msra.mxu0 0
      %468 = vmatprep.subr.bf16.mxu0 0
      %469 = vmatpush1.bf16.msra.mxu0 0
      %470 = vmatprep.subr.bf16.mxu0 0
      %471 = vmatpush1.bf16.msra.mxu0 0
      %472 = vmatprep.subr.bf16.mxu0 0
      %473 = vmatpush1.bf16.msra.mxu0 0
      %474 = vmatprep.subr.bf16.mxu0 0
      %475 = vmatpush1.bf16.msra.mxu0 0
      %476 = vmatprep.subr.bf16.mxu0 0
      %477 = vmatpush1.bf16.msra.mxu0 0
      %478 = vmatprep.subr.bf16.mxu0 0
      %479 = vmatpush1.bf16.msra.mxu0 0
      %480 = vmatprep.subr.bf16.mxu0 0
      %481 = vmatpush1.bf16.msra.mxu0 0
      %482 = vmatprep.subr.bf16.mxu0 0
      %483 = vmatpush1.bf16.msra.mxu0 0
      %484 = vmatprep.subr.bf16.mxu0 0
      %485 = vmatpush1.bf16.msra.mxu0 0
      %486 = vmatprep.mubr.bf16.mxu0 0
      %487 = vmatmul.mubr.bf16.gmra.mrb[0].mxu0 %v449
      %v488 = vpop.f32.mrb[0].mxu0
      %v489 = vadd.f32 0.0, %v488
      %v490 = vpop.f32.mrb[0].mxu0
      %v491 = vpop.f32.mrb[0].mxu0
      %v492 = vpop.f32.mrb[0].mxu0
      %493 = vdwg.mxu0
      %v494 = vpack.c.bf16 %v443, %v443
      %v495 = vpack.c.bf16 %v489, %v489
      %vm496 = vcmask 519168
      %497 = vst.msk [vmem:[%s251] sm:$0xf] %vm496, %v494
      %498 = vst.msk [vmem:[%s251 + $0x4] sm:$0xf] %vm496, %v495
      %p499 = scmp.lt.s32.totalorder %s15, 1
      %s500 = scalar_select %p499, %s15, 1
      %s501 = smul.addr %s500, 2
      %s502 = smul.addr %s501, 4
      %s503 = scalar_lea.vmem %s4, %s502
      // Predicated region
      $region37: #{generate_lm_forward.12} parent=35 // pred_check
        %p504 = pneg %p137
      $region38: #{generate_lm_forward.12} parent=35 // pred_check_branch
        %506 = sbr.rel (%p504) target = $region40
      $region39: #{generate_lm_forward.12} parent=35 // pred_region
        _
      $region40: #{generate_lm_forward.12} parent=35 // pred_fallthru
        _
    $region36: #{generate_lm_forward.12} parent=5 // pred_fallthru
      _
    %p507 = scmp.le.s32.totalorder 2, %s10
    // Predicated region
    $region41: #{generate_lm_forward.12} parent=5 // pred_check
      %p508 = pneg %p507
    $region42: #{generate_lm_forward.12} parent=5 // pred_check_branch
      %510 = sbr.rel (%p508) target = $region44
    $region43: #{generate_lm_forward.12} parent=5 // pred_region
      %s511 = ssub.s32 %s10, 2
      // Predicated region
      $region45: #{generate_lm_forward.12} parent=43 // pred_check
        %p512 = pneg %p143
      $region46: #{generate_lm_forward.12} parent=43 // pred_check_branch
        %514 = sbr.rel (%p512) target = $region48
      $region47: #{generate_lm_forward.12} parent=43 // pred_region
        %p515 = scmp.lt.s32.totalorder %s16, 1
        %s516 = scalar_select %p515, %s16, 1
        %s517 = smul.addr %s516, 2
        %s518 = smul.addr %s517, 4
        %s519 = scalar_lea.vmem %s4, %s518
      $region48: #{generate_lm_forward.12} parent=43 // pred_fallthru
        _
    $region44: #{generate_lm_forward.12} parent=5 // pred_fallthru
      _
  $region6: #{generate_lm_forward.12} parent=0 // loop_footer
    %s14 = sadd.s32 1, %s10
  $region7: #{generate_lm_forward.12} parent=0 // loop_footer_branch
    %9 = sbr.rel target = $region3
  $region8: #{generate_lm_forward.12} parent=0 // loop_exit
    _

// kernel: generate_lm_forward.19
$region0: #{generate_lm_forward.19}
  #allocation0 [shape = 'u32[]', space=smem, size = 0x4, offset = 0x4, fixed_abs, tag = 'smem constant byte address 0x4 - core index']
  #allocation1 [shape = 'u32[144,128]{1,0:T(1,128)}', space=vmem, size = 0x12000, scoped, tag = 'internal scratch']
  #allocation2 [shape = 'bf16[16,128]{1,0:T(16,128)(2,1)}', space=vmem, size = 0x1000, scoped, tag = 'scratch operand']
  %s0 = inlined_call_operand.vmem [shape: bf16[16,128], index: 0, kind: input, shape index: {}]
  %s1 = inlined_call_operand.vmem [shape: f32[1,128], index: 1, kind: input, shape index: {}]
  %s2 = inlined_call_operand.vmem [shape: f32[1,128], index: 2, kind: input, shape index: {}]
  %s3 = inlined_call_operand.vmem [shape: bf16[128,256], index: 3, kind: input, shape index: {}]
  %s4 = inlined_call_operand.vmem [shape: f32[1,256], index: 4, kind: input, shape index: {}]
  %s5 = inlined_call_operand.hbm [shape: f32[16,256], index: 5, kind: output, shape index: {}]
  %s6 = sld [smem:[#allocation0]]
  $region34: #{generate_lm_forward.19} parent=0
    _
  %s8 = ssub.s32 1, %s6
  %s9 = scalar_select 0, %s8, %s6
  $region1: #{generate_lm_forward.19} parent=0
    #allocation3 [shape = 'u8[16384]{0}', space=vmem, size = 0x4000, scoped, tag = 'output window, operand 0, single buffered']
    #allocation4 [shape = 's32[1]{0}', space=sflag, size = 0x4, scoped, tag = 'scoped memory for generate_lm_forward.19']
    %10 = vsyncpa [#allocation4], 0
    // Predicated region
    $region2: #{generate_lm_forward.19} parent=1 // pred_check
      _
    $region3: #{generate_lm_forward.19} parent=1 // pred_check_branch
      %12 = sbr.rel (0) target = $region5
    $region4: #{generate_lm_forward.19} parent=1 // pred_region
      _
    $region5: #{generate_lm_forward.19} parent=1 // pred_fallthru
      _
    // Predicated region
    $region6: #{generate_lm_forward.19} parent=1 // pred_check
      _
    $region7: #{generate_lm_forward.19} parent=1 // pred_check_branch
      %14 = sbr.rel (0) target = $region9
    $region8: #{generate_lm_forward.19} parent=1 // pred_region
      _
    $region9: #{generate_lm_forward.19} parent=1 // pred_fallthru
      _
    // Predicated region
    $region10: #{generate_lm_forward.19} parent=1 // pred_check
      _
    $region11: #{generate_lm_forward.19} parent=1 // pred_check_branch
      %16 = sbr.rel (0) target = $region13
    $region12: #{generate_lm_forward.19} parent=1 // pred_region
      _
    $region13: #{generate_lm_forward.19} parent=1 // pred_fallthru
      _
    // Predicated region
    $region14: #{generate_lm_forward.19} parent=1 // pred_check
      _
    $region15: #{generate_lm_forward.19} parent=1 // pred_check_branch
      %18 = sbr.rel (0) target = $region17
    $region16: #{generate_lm_forward.19} parent=1 // pred_region
      _
    $region17: #{generate_lm_forward.19} parent=1 // pred_fallthru
      _
    // Predicated region
    $region18: #{generate_lm_forward.19} parent=1 // pred_check
      _
    $region19: #{generate_lm_forward.19} parent=1 // pred_check_branch
      %20 = sbr.rel (0) target = $region21
    $region20: #{generate_lm_forward.19} parent=1 // pred_region
      _
    $region21: #{generate_lm_forward.19} parent=1 // pred_fallthru
      _
    %p22 = scmp.eq.s32.totalorder 0, 0
    // Predicated region
    $region22: #{generate_lm_forward.19} parent=1 // pred_check
      %p23 = pneg %p22
    $region23: #{generate_lm_forward.19} parent=1 // pred_check_branch
      %25 = sbr.rel (%p23) target = $region25
    $region24: #{generate_lm_forward.19} parent=1 // pred_region
      %v26 = vld [vmem:[%s0] sm:$0xf]
      %v27 = vld [vmem:[%s0 + $0x4] sm:$0xf]
      %v28 = vld [vmem:[%s1] sm:$0x1]
      %v29 = vld [vmem:[%s2] sm:$0x1]
      %v30 = vunpack.c.l.bf16 %v26
      %v31 = vunpack.c.l.bf16 %v27
      %32 = vadd.xlane.f32.xlu0 %v30
      %v33 = vpop.xlane.xlu0 %32
      %34 = vadd.xlane.f32.xlu0 %v31
      %v35 = vpop.xlane.xlu0 %34
      %v36 = vrcp.pop 128.0
      %v37 = vmul.f32 %v33, %v36
      %v38 = vmul.f32 %v35, %v36
      %v39 = vsub.f32 %v30, %v37
      %v40 = vsub.f32 %v31, %v38
      %v41 = vmul.f32 %v39, %v39
      %v42 = vmul.f32 %v40, %v40
      %43 = vadd.xlane.f32.xlu0 %v41
      %v44 = vpop.xlane.xlu0 %43
      %45 = vadd.xlane.f32.xlu0 %v42
      %v46 = vpop.xlane.xlu0 %45
      %v47 = vmul.f32 %v44, %v36
      %v48 = vmul.f32 %v46, %v36
      %v49 = vadd.f32 %v47, 1e-06
      %v50 = vadd.f32 %v48, 1e-06
      %v51 = vrsqrt.pop %v49
      %v52 = vrsqrt.pop %v50
      %v53 = vmul.f32 %v39, %v51
      %v54 = vmul.f32 %v40, %v52
      %v56 = vlaneseq
      %v57 = vshrl.u32 %v56, 7
      %v58 = vsub.s32 0, %v57
      %v59 = vrot.slane %v28, %v58
      %v61 = vmul.f32 %v53, %v59
      %v62 = vmul.f32 %v54, %v59
      %v64 = vlaneseq
      %v65 = vshrl.u32 %v64, 7
      %v66 = vsub.s32 0, %v65
      %v67 = vrot.slane %v29, %v66
      %v69 = vadd.f32 %v61, %v67
      %v70 = vadd.f32 %v62, %v67
      %v71 = vpack.c.bf16 %v70, %v69
      %72 = vst [vmem:[#allocation2] sm:$0xff] %v71
    $region25: #{generate_lm_forward.19} parent=1 // pred_fallthru
      _
    %v73 = vld [vmem:[#allocation2] sm:$0xff]
    %v74 = vld [vmem:[%s3] sm:$0xff]
    %v75 = vld [vmem:[%s3 + $0x8] sm:$0xff]
    %v76 = vld [vmem:[%s3 + $0x10] sm:$0xff]
    %v77 = vld [vmem:[%s3 + $0x18] sm:$0xff]
    %v78 = vld [vmem:[%s3 + $0x20] sm:$0xff]
    %v79 = vld [vmem:[%s3 + $0x28] sm:$0xff]
    %v80 = vld [vmem:[%s3 + $0x30] sm:$0xff]
    %v81 = vld [vmem:[%s3 + $0x38] sm:$0xff]
    %v82 = vld [vmem:[%s3 + $0x40] sm:$0xff]
    %v83 = vld [vmem:[%s3 + $0x48] sm:$0xff]
    %v84 = vld [vmem:[%s3 + $0x50] sm:$0xff]
    %v85 = vld [vmem:[%s3 + $0x58] sm:$0xff]
    %v86 = vld [vmem:[%s3 + $0x60] sm:$0xff]
    %v87 = vld [vmem:[%s3 + $0x68] sm:$0xff]
    %v88 = vld [vmem:[%s3 + $0x70] sm:$0xff]
    %v89 = vld [vmem:[%s3 + $0x78] sm:$0xff]
    %v90 = vld [vmem:[%s4] sm:$0x3]
    %v92 = vlaneseq
    %v93 = vshrl.u32 %v92, 7
    %v94 = vsub.s32 0, %v93
    %v95 = vrot.slane %v90, %v94
    %v96 = vlaneseq
    %v97 = vshrl.u32 %v96, 7
    %v98 = vsub.s32 1, %v97
    %v99 = vrot.slane %v90, %v98
    %v118 = vunpack.c.l.b16 %v74
    %v119 = vunpack.c.h.b16 %v74
    %v120 = vunpack.c.l.b16 %v75
    %v121 = vunpack.c.h.b16 %v75
    %v122 = vunpack.c.l.b16 %v76
    %v123 = vunpack.c.h.b16 %v76
    %v124 = vunpack.c.l.b16 %v77
    %v125 = vunpack.c.h.b16 %v77
    %v126 = vunpack.c.l.b16 %v78
    %v127 = vunpack.c.h.b16 %v78
    %v128 = vunpack.c.l.b16 %v79
    %v129 = vunpack.c.h.b16 %v79
    %v130 = vunpack.c.l.b16 %v80
    %v131 = vunpack.c.h.b16 %v80
    %v132 = vunpack.c.l.b16 %v81
    %v133 = vunpack.c.h.b16 %v81
    %v134 = vunpack.c.l.b16 %v82
    %v135 = vunpack.c.h.b16 %v82
    %v136 = vunpack.c.l.b16 %v83
    %v137 = vunpack.c.h.b16 %v83
    %v138 = vunpack.c.l.b16 %v84
    %v139 = vunpack.c.h.b16 %v84
    %v140 = vunpack.c.l.b16 %v85
    %v141 = vunpack.c.h.b16 %v85
    %v142 = vunpack.c.l.b16 %v86
    %v143 = vunpack.c.h.b16 %v86
    %v144 = vunpack.c.l.b16 %v87
    %v145 = vunpack.c.h.b16 %v87
    %v146 = vunpack.c.l.b16 %v88
    %v147 = vunpack.c.h.b16 %v88
    %v148 = vunpack.c.l.b16 %v89
    %v149 = vunpack.c.h.b16 %v89
    %v150 = vpack.c.b16 %v120, %v118
    %v151 = vpack.c.b16 %v121, %v119
    %v152 = vpack.c.b16 %v124, %v122
    %v153 = vpack.c.b16 %v125, %v123
    %v154 = vpack.c.b16 %v128, %v126
    %v155 = vpack.c.b16 %v129, %v127
    %v156 = vpack.c.b16 %v132, %v130
    %v157 = vpack.c.b16 %v133, %v131
    %v158 = vpack.c.b16 %v136, %v134
    %v159 = vpack.c.b16 %v137, %v135
    %v160 = vpack.c.b16 %v140, %v138
    %v161 = vpack.c.b16 %v141, %v139
    %v162 = vpack.c.b16 %v144, %v142
    %v163 = vpack.c.b16 %v145, %v143
    %v164 = vpack.c.b16 %v148, %v146
    %v165 = vpack.c.b16 %v149, %v147
    %182 = vmatprep.subr.bf16.mxu0 %v151
    %183 = vmatpush1.bf16.msra.mxu0 %v150
    %184 = vmatprep.subr.bf16.mxu0 %v153
    %185 = vmatpush1.bf16.msra.mxu0 %v152
    %186 = vmatprep.subr.bf16.mxu0 %v155
    %187 = vmatpush1.bf16.msra.mxu0 %v154
    %188 = vmatprep.subr.bf16.mxu0 %v157
    %189 = vmatpush1.bf16.msra.mxu0 %v156
    %190 = vmatprep.subr.bf16.mxu0 %v159
    %191 = vmatpush1.bf16.msra.mxu0 %v158
    %192 = vmatprep.subr.bf16.mxu0 %v161
    %193 = vmatpush1.bf16.msra.mxu0 %v160
    %194 = vmatprep.subr.bf16.mxu0 %v163
    %195 = vmatpush1.bf16.msra.mxu0 %v162
    %196 = vmatprep.subr.bf16.mxu0 %v165
    %197 = vmatpush1.bf16.msra.mxu0 %v164
    %198 = vmatprep.subr.bf16.mxu0 0
    %199 = vmatpush1.bf16.msra.mxu0 0
    %200 = vmatprep.subr.bf16.mxu0 0
    %201 = vmatpush1.bf16.msra.mxu0 0
    %202 = vmatprep.subr.bf16.mxu0 0
    %203 = vmatpush1.bf16.msra.mxu0 0
    %204 = vmatprep.subr.bf16.mxu0 0
    %205 = vmatpush1.bf16.msra.mxu0 0
    %206 = vmatprep.subr.bf16.mxu0 0
    %207 = vmatpush1.bf16.msra.mxu0 0
    %208 = vmatprep.subr.bf16.mxu0 0
    %209 = vmatpush1.bf16.msra.mxu0 0
    %210 = vmatprep.subr.bf16.mxu0 0
    %211 = vmatpush1.bf16.msra.mxu0 0
    %212 = vmatprep.subr.bf16.mxu0 0
    %213 = vmatpush1.bf16.msra.mxu0 0
    %214 = vmatprep.mubr.bf16.mxu0 0
    %215 = vmatmul.mubr.bf16.gmra.mrb[0].mxu0 %v73
    %v216 = vpop.f32.mrb[0].mxu0
    %v217 = vadd.f32 %v95, %v216
    %v218 = vpop.f32.mrb[0].mxu0
    %v219 = vadd.f32 %v99, %v218
    %v220 = vpop.f32.mrb[0].mxu0
    %v221 = vadd.f32 %v95, %v220
    %v222 = vpop.f32.mrb[0].mxu0
    %v223 = vadd.f32 %v99, %v222
    %224 = vdwg.mxu0
    %225 = vst [vmem:[#allocation3] sm:$0xff] %v217
    %226 = vst [vmem:[#allocation3 + $0x8] sm:$0xff] %v219
    %227 = vst [vmem:[#allocation3 + $0x10] sm:$0xff] %v221
    %228 = vst [vmem:[#allocation3 + $0x18] sm:$0xff] %v223
    // Predicated region
    $region26: #{generate_lm_forward.19} parent=1 // pred_check
      _
    $region27: #{generate_lm_forward.19} parent=1 // pred_check_branch
      %230 = sbr.rel (0) target = $region29
    $region28: #{generate_lm_forward.19} parent=1 // pred_region
      %s232 = ssub.s32 512, 512
      %233 = vsyncadd [#allocation4], %s232
      %s234 = sshll.u32 [#allocation3], 4
      %s235 = int_to_ptr.vmem [resolvable:$true] %s234
      %240 = dma.vmem_to_hbm [thread:$0]  %s235, 512, %s5, [#allocation4], 256, 256, 16
    $region29: #{generate_lm_forward.19} parent=1 // pred_fallthru
      _
    // Predicated region
    $region30: #{generate_lm_forward.19} parent=1 // pred_check
      _
    $region31: #{generate_lm_forward.19} parent=1 // pred_check_branch
      %242 = sbr.rel (0) target = $region33
    $region32: #{generate_lm_forward.19} parent=1 // pred_region
      %243 = dma.done [#allocation4], 512
    $region33: #{generate_lm_forward.19} parent=1 // pred_fallthru
      _
    %244 = vsyncpa [#allocation4], 1

// kernel: generate_lm_forward.14
$region0: #{generate_lm_forward.14}
  #allocation0 [shape = 'u32[]', space=smem, size = 0x4, offset = 0x4, fixed_abs, tag = 'smem constant byte address 0x4 - core index']
  #allocation1 [shape = 'u32[144,128]{1,0:T(1,128)}', space=vmem, size = 0x12000, scoped, tag = 'internal scratch']
  #allocation2 [shape = 'bf16[16,128]{1,0:T(16,128)(2,1)}', space=vmem, size = 0x1000, scoped, tag = 'scratch operand']
  #allocation3 [shape = 'f32[16,128]{1,0:T(8,128)}', space=vmem, size = 0x2000, scoped, tag = 'scratch operand']
  %s0 = inlined_call_operand.vmem [shape: bf16[16,128], index: 0, kind: input, shape index: {}]
  %s1 = inlined_call_operand.vmem [shape: f32[1,128], index: 1, kind: input, shape index: {}]
  %s2 = inlined_call_operand.vmem [shape: f32[1,128], index: 2, kind: input, shape index: {}]
  %s3 = inlined_call_operand.vmem [shape: bf16[128,512], index: 3, kind: input, shape index: {}]
  %s4 = inlined_call_operand.vmem [shape: f32[1,512], index: 4, kind: input, shape index: {}]
  %s5 = inlined_call_operand.vmem [shape: bf16[512,128], index: 5, kind: input, shape index: {}]
  %s6 = inlined_call_operand.vmem [shape: f32[1,128], index: 6, kind: input, shape index: {}]
  %s7 = inlined_call_operand.vmem [shape: bf16[16,128], index: 7, kind: output, shape index: {}]
  %s8 = sld [smem:[#allocation0]]
  $region46: #{generate_lm_forward.14} parent=0
    _
  %s10 = ssub.s32 1, %s8
  %s11 = scalar_select 0, %s10, %s8
  // Predicated region
  $region2: #{generate_lm_forward.14} parent=0 // pred_check
    _
  $region3: #{generate_lm_forward.14} parent=0 // pred_check_branch
    %13 = sbr.rel (0) target = $region5
  $region4: #{generate_lm_forward.14} parent=0 // pred_region
    _
  $region5: #{generate_lm_forward.14} parent=0 // pred_fallthru
    _
  // Predicated region
  $region6: #{generate_lm_forward.14} parent=0 // pred_check
    _
  $region7: #{generate_lm_forward.14} parent=0 // pred_check_branch
    %15 = sbr.rel (0) target = $region9
  $region8: #{generate_lm_forward.14} parent=0 // pred_region
    _
  $region9: #{generate_lm_forward.14} parent=0 // pred_fallthru
    _
  // Predicated region
  $region10: #{generate_lm_forward.14} parent=0 // pred_check
    _
  $region11: #{generate_lm_forward.14} parent=0 // pred_check_branch
    %17 = sbr.rel (0) target = $region13
  $region12: #{generate_lm_forward.14} parent=0 // pred_region
    _
  $region13: #{generate_lm_forward.14} parent=0 // pred_fallthru
    _
  // Predicated region
  $region14: #{generate_lm_forward.14} parent=0 // pred_check
    _
  $region15: #{generate_lm_forward.14} parent=0 // pred_check_branch
    %19 = sbr.rel (0) target = $region17
  $region16: #{generate_lm_forward.14} parent=0 // pred_region
    _
  $region17: #{generate_lm_forward.14} parent=0 // pred_fallthru
    _
  // Predicated region
  $region18: #{generate_lm_forward.14} parent=0 // pred_check
    _
  $region19: #{generate_lm_forward.14} parent=0 // pred_check_branch
    %21 = sbr.rel (0) target = $region21
  $region20: #{generate_lm_forward.14} parent=0 // pred_region
    _
  $region21: #{generate_lm_forward.14} parent=0 // pred_fallthru
    _
  // Predicated region
  $region22: #{generate_lm_forward.14} parent=0 // pred_check
    _
  $region23: #{generate_lm_forward.14} parent=0 // pred_check_branch
    %23 = sbr.rel (0) target = $region25
  $region24: #{generate_lm_forward.14} parent=0 // pred_region
    _
  $region25: #{generate_lm_forward.14} parent=0 // pred_fallthru
    _
  // Predicated region
  $region26: #{generate_lm_forward.14} parent=0 // pred_check
    _
  $region27: #{generate_lm_forward.14} parent=0 // pred_check_branch
    %25 = sbr.rel (0) target = $region29
  $region28: #{generate_lm_forward.14} parent=0 // pred_region
    _
  $region29: #{generate_lm_forward.14} parent=0 // pred_fallthru
    _
  %p27 = scmp.eq.s32.totalorder 0, 0
  // Predicated region
  $region30: #{generate_lm_forward.14} parent=0 // pred_check
    %p28 = pneg %p27
  $region31: #{generate_lm_forward.14} parent=0 // pred_check_branch
    %30 = sbr.rel (%p28) target = $region33
  $region32: #{generate_lm_forward.14} parent=0 // pred_region
    %v31 = vld [vmem:[%s0] sm:$0xf]
    %v32 = vld [vmem:[%s0 + $0x4] sm:$0xf]
    %v33 = vld [vmem:[%s1] sm:$0x1]
    %v34 = vld [vmem:[%s2] sm:$0x1]
    %v35 = vunpack.c.l.bf16 %v31
    %v36 = vunpack.c.l.bf16 %v32
    %37 = vadd.xlane.f32.xlu0 %v35
    %v38 = vpop.xlane.xlu0 %37
    %39 = vadd.xlane.f32.xlu0 %v36
    %v40 = vpop.xlane.xlu0 %39
    %v41 = vrcp.pop 128.0
    %v42 = vmul.f32 %v38, %v41
    %v43 = vmul.f32 %v40, %v41
    %v44 = vsub.f32 %v35, %v42
    %v45 = vsub.f32 %v36, %v43
    %v46 = vmul.f32 %v44, %v44
    %v47 = vmul.f32 %v45, %v45
    %48 = vadd.xlane.f32.xlu0 %v46
    %v49 = vpop.xlane.xlu0 %48
    %50 = vadd.xlane.f32.xlu0 %v47
    %v51 = vpop.xlane.xlu0 %50
    %v52 = vmul.f32 %v49, %v41
    %v53 = vmul.f32 %v51, %v41
    %v54 = vadd.f32 %v52, 1e-06
    %v55 = vadd.f32 %v53, 1e-06
    %v56 = vrsqrt.pop %v54
    %v57 = vrsqrt.pop %v55
    %v58 = vmul.f32 %v44, %v56
    %v59 = vmul.f32 %v45, %v57
    %v61 = vlaneseq
    %v62 = vshrl.u32 %v61, 7
    %v63 = vsub.s32 0, %v62
    %v64 = vrot.slane %v33, %v63
    %v66 = vmul.f32 %v58, %v64
    %v67 = vmul.f32 %v59, %v64
    %v69 = vlaneseq
    %v70 = vshrl.u32 %v69, 7
    %v71 = vsub.s32 0, %v70
    %v72 = vrot.slane %v34, %v71
    %v74 = vadd.f32 %v66, %v72
    %v75 = vadd.f32 %v67, %v72
    %v76 = vpack.c.bf16 %v75, %v74
    %77 = vst [vmem:[#allocation2] sm:$0xff] %v76
    %78 = vst [vmem:[#allocation3] sm:$0xff] 0.0
    %79 = vst [vmem:[#allocation3 + $0x8] sm:$0xff] 0.0
  $region33: #{generate_lm_forward.14} parent=0 // pred_fallthru
    _
  %v80 = vld [vmem:[#allocation2] sm:$0xff]
  %v81 = vld [vmem:[%s3] sm:$0xff]
  %v82 = vld [vmem:[%s3 + $0x8] sm:$0xff]
  %v83 = vld [vmem:[%s3 + $0x10] sm:$0xff]
  %v84 = vld [vmem:[%s3 + $0x18] sm:$0xff]
  %v85 = vld [vmem:[%s3 + $0x20] sm:$0xff]
  %v86 = vld [vmem:[%s3 + $0x28] sm:$0xff]
  %v87 = vld [vmem:[%s3 + $0x30] sm:$0xff]
  %v88 = vld [vmem:[%s3 + $0x38] sm:$0xff]
  %v89 = vld [vmem:[%s3 + $0x40] sm:$0xff]
  %v90 = vld [vmem:[%s3 + $0x48] sm:$0xff]
  %v91 = vld [vmem:[%s3 + $0x50] sm:$0xff]
  %v92 = vld [vmem:[%s3 + $0x58] sm:$0xff]
  %v93 = vld [vmem:[%s3 + $0x60] sm:$0xff]
  %v94 = vld [vmem:[%s3 + $0x68] sm:$0xff]
  %v95 = vld [vmem:[%s3 + $0x70] sm:$0xff]
  %v96 = vld [vmem:[%s3 + $0x78] sm:$0xff]
  %v97 = vld [vmem:[%s3 + $0x80] sm:$0xff]
  %v98 = vld [vmem:[%s3 + $0x88] sm:$0xff]
  %v99 = vld [vmem:[%s3 + $0x90] sm:$0xff]
  %v100 = vld [vmem:[%s3 + $0x98] sm:$0xff]
  %v101 = vld [vmem:[%s3 + $0xa0] sm:$0xff]
  %v102 = vld [vmem:[%s3 + $0xa8] sm:$0xff]
  %v103 = vld [vmem:[%s3 + $0xb0] sm:$0xff]
  %v104 = vld [vmem:[%s3 + $0xb8] sm:$0xff]
  %v105 = vld [vmem:[%s3 + $0xc0] sm:$0xff]
  %v106 = vld [vmem:[%s3 + $0xc8] sm:$0xff]
  %v107 = vld [vmem:[%s3 + $0xd0] sm:$0xff]
  %v108 = vld [vmem:[%s3 + $0xd8] sm:$0xff]
  %v109 = vld [vmem:[%s3 + $0xe0] sm:$0xff]
  %v110 = vld [vmem:[%s3 + $0xe8] sm:$0xff]
  %v111 = vld [vmem:[%s3 + $0xf0] sm:$0xff]
  %v112 = vld [vmem:[%s3 + $0xf8] sm:$0xff]
  %v113 = vld [vmem:[%s4] sm:$0xf]
  %v115 = vlaneseq
  %v116 = vshrl.u32 %v115, 7
  %v117 = vsub.s32 0, %v116
  %v118 = vrot.slane %v113, %v117
  %v119 = vlaneseq
  %v120 = vshrl.u32 %v119, 7
  %v121 = vsub.s32 1, %v120
  %v122 = vrot.slane %v113, %v121
  %v123 = vlaneseq
  %v124 = vshrl.u32 %v123, 7
  %v125 = vsub.s32 2, %v124
  %v126 = vrot.slane %v113, %v125
  %v127 = vlaneseq
  %v128 = vshrl.u32 %v127, 7
  %v129 = vsub.s32 3, %v128
  %v130 = vrot.slane %v113, %v129
  %v167 = vunpack.c.l.b16 %v81
  %v168 = vunpack.c.h.b16 %v81
  %v169 = vunpack.c.l.b16 %v82
  %v170 = vunpack.c.h.b16 %v82
  %v171 = vunpack.c.l.b16 %v83
  %v172 = vunpack.c.h.b16 %v83
  %v173 = vunpack.c.l.b16 %v84
  %v174 = vunpack.c.h.b16 %v84
  %v175 = vunpack.c.l.b16 %v85
  %v176 = vunpack.c.h.b16 %v85
  %v177 = vunpack.c.l.b16 %v86
  %v178 = vunpack.c.h.b16 %v86
  %v179 = vunpack.c.l.b16 %v87
  %v180 = vunpack.c.h.b16 %v87
  %v181 = vunpack.c.l.b16 %v88
  %v182 = vunpack.c.h.b16 %v88
  %v183 = vunpack.c.l.b16 %v89
  %v184 = vunpack.c.h.b16 %v89
  %v185 = vunpack.c.l.b16 %v90
  %v186 = vunpack.c.h.b16 %v90
  %v187 = vunpack.c.l.b16 %v91
  %v188 = vunpack.c.h.b16 %v91
  %v189 = vunpack.c.l.b16 %v92
  %v190 = vunpack.c.h.b16 %v92
  %v191 = vunpack.c.l.b16 %v93
  %v192 = vunpack.c.h.b16 %v93
  %v193 = vunpack.c.l.b16 %v94
  %v194 = vunpack.c.h.b16 %v94
  %v195 = vunpack.c.l.b16 %v95
  %v196 = vunpack.c.h.b16 %v95
  %v197 = vunpack.c.l.b16 %v96
  %v198 = vunpack.c.h.b16 %v96
  %v199 = vunpack.c.l.b16 %v97
  %v200 = vunpack.c.h.b16 %v97
  %v201 = vunpack.c.l.b16 %v98
  %v202 = vunpack.c.h.b16 %v98
  %v203 = vunpack.c.l.b16 %v99
  %v204 = vunpack.c.h.b16 %v99
  %v205 = vunpack.c.l.b16 %v100
  %v206 = vunpack.c.h.b16 %v100
  %v207 = vunpack.c.l.b16 %v101
  %v208 = vunpack.c.h.b16 %v101
  %v209 = vunpack.c.l.b16 %v102
  %v210 = vunpack.c.h.b16 %v102
  %v211 = vunpack.c.l.b16 %v103
  %v212 = vunpack.c.h.b16 %v103
  %v213 = vunpack.c.l.b16 %v104
  %v214 = vunpack.c.h.b16 %v104
  %v215 = vunpack.c.l.b16 %v105
  %v216 = vunpack.c.h.b16 %v105
  %v217 = vunpack.c.l.b16 %v106
  %v218 = vunpack.c.h.b16 %v106
  %v219 = vunpack.c.l.b16 %v107
  %v220 = vunpack.c.h.b16 %v107
  %v221 = vunpack.c.l.b16 %v108
  %v222 = vunpack.c.h.b16 %v108
  %v223 = vunpack.c.l.b16 %v109
  %v224 = vunpack.c.h.b16 %v109
  %v225 = vunpack.c.l.b16 %v110
  %v226 = vunpack.c.h.b16 %v110
  %v227 = vunpack.c.l.b16 %v111
  %v228 = vunpack.c.h.b16 %v111
  %v229 = vunpack.c.l.b16 %v112
  %v230 = vunpack.c.h.b16 %v112
  %v231 = vpack.c.b16 %v171, %v167
  %v232 = vpack.c.b16 %v172, %v168
  %v233 = vpack.c.b16 %v173, %v169
  %v234 = vpack.c.b16 %v174, %v170
  %v235 = vpack.c.b16 %v179, %v175
  %v236 = vpack.c.b16 %v180, %v176
  %v237 = vpack.c.b16 %v181, %v177
  %v238 = vpack.c.b16 %v182, %v178
  %v239 = vpack.c.b16 %v187, %v183
  %v240 = vpack.c.b16 %v188, %v184
  %v241 = vpack.c.b16 %v189, %v185
  %v242 = vpack.c.b16 %v190, %v186
  %v243 = vpack.c.b16 %v195, %v191
  %v244 = vpack.c.b16 %v196, %v192
  %v245 = vpack.c.b16 %v197, %v193
  %v246 = vpack.c.b16 %v198, %v194
  %v247 = vpack.c.b16 %v203, %v199
  %v248 = vpack.c.b16 %v204, %v200
  %v249 = vpack.c.b16 %v205, %v201
  %v250 = vpack.c.b16 %v206, %v202
  %v251 = vpack.c.b16 %v211, %v207
  %v252 = vpack.c.b16 %v212, %v208
  %v253 = vpack.c.b16 %v213, %v209
  %v254 = vpack.c.b16 %v214, %v210
  %v255 = vpack.c.b16 %v219, %v215
  %v256 = vpack.c.b16 %v220, %v216
  %v257 = vpack.c.b16 %v221, %v217
  %v258 = vpack.c.b16 %v222, %v218
  %v259 = vpack.c.b16 %v227, %v223
  %v260 = vpack.c.b16 %v228, %v224
  %v261 = vpack.c.b16 %v229, %v225
  %v262 = vpack.c.b16 %v230, %v226
  %295 = vmatprep.subr.bf16.mxu0 %v232
  %296 = vmatpush1.bf16.msra.mxu0 %v231
  %297 = vmatprep.subr.bf16.mxu0 %v236
  %298 = vmatpush1.bf16.msra.mxu0 %v235
  %299 = vmatprep.subr.bf16.mxu0 %v240
  %300 = vmatpush1.bf16.msra.mxu0 %v239
  %301 = vmatprep.subr.bf16.mxu0 %v244
  %302 = vmatpush1.bf16.msra.mxu0 %v243
  %303 = vmatprep.subr.bf16.mxu0 %v248
  %304 = vmatpush1.bf16.msra.mxu0 %v247
  %305 = vmatprep.subr.bf16.mxu0 %v252
  %306 = vmatpush1.bf16.msra.mxu0 %v251
  %307 = vmatprep.subr.bf16.mxu0 %v256
  %308 = vmatpush1.bf16.msra.mxu0 %v255
  %309 = vmatprep.subr.bf16.mxu0 %v260
  %310 = vmatpush1.bf16.msra.mxu0 %v259
  %311 = vmatprep.subr.bf16.mxu0 0
  %312 = vmatpush1.bf16.msra.mxu0 0
  %313 = vmatprep.subr.bf16.mxu0 0
  %314 = vmatpush1.bf16.msra.mxu0 0
  %315 = vmatprep.subr.bf16.mxu0 0
  %316 = vmatpush1.bf16.msra.mxu0 0
  %317 = vmatprep.subr.bf16.mxu0 0
  %318 = vmatpush1.bf16.msra.mxu0 0
  %319 = vmatprep.subr.bf16.mxu0 0
  %320 = vmatpush1.bf16.msra.mxu0 0
  %321 = vmatprep.subr.bf16.mxu0 0
  %322 = vmatpush1.bf16.msra.mxu0 0
  %323 = vmatprep.subr.bf16.mxu0 0
  %324 = vmatpush1.bf16.msra.mxu0 0
  %325 = vmatprep.subr.bf16.mxu0 0
  %326 = vmatpush1.bf16.msra.mxu0 0
  %327 = vmatprep.mubr.bf16.mxu0 0
  %328 = vmatmul.mubr.bf16.gmra.mrb[0].mxu0 %v80
  %v329 = vpop.f32.mrb[0].mxu0
  %v330 = vadd.f32 %v118, %v329
  %v331 = vpop.f32.mrb[0].mxu0
  %v332 = vadd.f32 %v122, %v331
  %v333 = vpop.f32.mrb[0].mxu0
  %v334 = vadd.f32 %v118, %v333
  %v335 = vpop.f32.mrb[0].mxu0
  %v336 = vadd.f32 %v122, %v335
  %337 = vdwg.mxu0
  %338 = vmatprep.subr.bf16.mxu0 %v234
  %339 = vmatpush1.bf16.msra.mxu0 %v233
  %340 = vmatprep.subr.bf16.mxu0 %v238
  %341 = vmatpush1.bf16.msra.mxu0 %v237
  %342 = vmatprep.subr.bf16.mxu0 %v242
  %343 = vmatpush1.bf16.msra.mxu0 %v241
  %344 = vmatprep.subr.bf16.mxu0 %v246
  %345 = vmatpush1.bf16.msra.mxu0 %v245
  %346 = vmatprep.subr.bf16.mxu0 %v250
  %347 = vmatpush1.bf16.msra.mxu0 %v249
  %348 = vmatprep.subr.bf16.mxu0 %v254
  %349 = vmatpush1.bf16.msra.mxu0 %v253
  %350 = vmatprep.subr.bf16.mxu0 %v258
  %351 = vmatpush1.bf16.msra.mxu0 %v257
  %352 = vmatprep.subr.bf16.mxu0 %v262
  %353 = vmatpush1.bf16.msra.mxu0 %v261
  %354 = vmatprep.subr.bf16.mxu0 0
  %355 = vmatpush1.bf16.msra.mxu0 0
  %356 = vmatprep.subr.bf16.mxu0 0
  %357 = vmatpush1.bf16.msra.mxu0 0
  %358 = vmatprep.subr.bf16.mxu0 0
  %359 = vmatpush1.bf16.msra.mxu0 0
  %360 = vmatprep.subr.bf16.mxu0 0
  %361 = vmatpush1.bf16.msra.mxu0 0
  %362 = vmatprep.subr.bf16.mxu0 0
  %363 = vmatpush1.bf16.msra.mxu0 0
  %364 = vmatprep.subr.bf16.mxu0 0
  %365 = vmatpush1.bf16.msra.mxu0 0
  %366 = vmatprep.subr.bf16.mxu0 0
  %367 = vmatpush1.bf16.msra.mxu0 0
  %368 = vmatprep.subr.bf16.mxu0 0
  %369 = vmatpush1.bf16.msra.mxu0 0
  %370 = vmatprep.mubr.bf16.mxu0 0
  %371 = vmatmul.mubr.bf16.gmra.mrb[0].mxu0 %v80
  %v372 = vpop.f32.mrb[0].mxu0
  %v373 = vadd.f32 %v126, %v372
  %v374 = vpop.f32.mrb[0].mxu0
  %v375 = vadd.f32 %v130, %v374
  %v376 = vpop.f32.mrb[0].mxu0
  %v377 = vadd.f32 %v126, %v376
  %v378 = vpop.f32.mrb[0].mxu0
  %v379 = vadd.f32 %v130, %v378
  %380 = vdwg.mxu0
  %v381 = vmul.f32 %v330, 0.5
  %v382 = vmul.f32 %v332, 0.5
  %v383 = vmul.f32 %v373, 0.5
  %v384 = vmul.f32 %v375, 0.5
  %v385 = vmul.f32 %v334, 0.5
  %v386 = vmul.f32 %v336, 0.5
  %v387 = vmul.f32 %v377, 0.5
  %v388 = vmul.f32 %v379, 0.5
  %v389 = vmul.f32 %v330, 0.044715
  %v390 = vmul.f32 %v332, 0.044715
  %v391 = vmul.f32 %v373, 0.044715
  %v392 = vmul.f32 %v375, 0.044715
  %v393 = vmul.f32 %v334, 0.044715
  %v394 = vmul.f32 %v336, 0.044715
  %v395 = vmul.f32 %v377, 0.044715
  %v396 = vmul.f32 %v379, 0.044715
  %v397 = vmul.f32 %v389, %v330
  %v398 = vmul.f32 %v390, %v332
  %v399 = vmul.f32 %v391, %v373
  %v400 = vmul.f32 %v392, %v375
  %v401 = vmul.f32 %v393, %v334
  %v402 = vmul.f32 %v394, %v336
  %v403 = vmul.f32 %v395, %v377
  %v404 = vmul.f32 %v396, %v379
  %v405 = vmul.f32 %v397, %v330
  %v406 = vmul.f32 %v398, %v332
  %v407 = vmul.f32 %v399, %v373
  %v408 = vmul.f32 %v400, %v375
  %v409 = vmul.f32 %v401, %v334
  %v410 = vmul.f32 %v402, %v336
  %v411 = vmul.f32 %v403, %v377
  %v412 = vmul.f32 %v404, %v379
  %v413 = vadd.f32 %v330, %v405
  %v414 = vadd.f32 %v332, %v406
  %v415 = vadd.f32 %v373, %v407
  %v416 = vadd.f32 %v375, %v408
  %v417 = vadd.f32 %v334, %v409
  %v418 = vadd.f32 %v336, %v410
  %v419 = vadd.f32 %v377, %v411
  %v420 = vadd.f32 %v379, %v412
  %v421 = vmul.f32 %v413, 0.7978846
  %v422 = vmul.f32 %v414, 0.7978846
  %v423 = vmul.f32 %v415, 0.7978846
  %v424 = vmul.f32 %v416, 0.7978846
  %v425 = vmul.f32 %v417, 0.7978846
  %v426 = vmul.f32 %v418, 0.7978846
  %v427 = vmul.f32 %v419, 0.7978846
  %v428 = vmul.f32 %v420, 0.7978846
  %v429 = vtanh.pop %v421
  %v430 = vtanh.pop %v422
  %v431 = vtanh.pop %v423
  %v432 = vtanh.pop %v424
  %v433 = vtanh.pop %v425
  %v434 = vtanh.pop %v426
  %v435 = vtanh.pop %v427
  %v436 = vtanh.pop %v428
  %v437 = vadd.f32 %v429, 1.0
  %v438 = vadd.f32 %v430, 1.0
  %v439 = vadd.f32 %v431, 1.0
  %v440 = vadd.f32 %v432, 1.0
  %v441 = vadd.f32 %v433, 1.0
  %v442 = vadd.f32 %v434, 1.0
  %v443 = vadd.f32 %v435, 1.0
  %v444 = vadd.f32 %v436, 1.0
  %v445 = vmul.f32 %v381, %v437
  %v446 = vmul.f32 %v382, %v438
  %v447 = vmul.f32 %v383, %v439
  %v448 = vmul.f32 %v384, %v440
  %v449 = vmul.f32 %v385, %v441
  %v450 = vmul.f32 %v386, %v442
  %v451 = vmul.f32 %v387, %v443
  %v452 = vmul.f32 %v388, %v444
  %v453 = vld [vmem:[#allocation3] sm:$0xff]
  %v454 = vld [vmem:[#allocation3 + $0x8] sm:$0xff]
  %v455 = vpack.c.bf16 %v449, %v445
  %v456 = vpack.c.bf16 %v450, %v446
  %v457 = vpack.c.bf16 %v451, %v447
  %v458 = vpack.c.bf16 %v452, %v448
  %v459 = vld [vmem:[%s5] sm:$0xf]
  %v460 = vld [vmem:[%s5 + $0x4] sm:$0xf]
  %v461 = vld [vmem:[%s5 + $0x8] sm:$0xf]
  %v462 = vld [vmem:[%s5 + $0xc] sm:$0xf]
  %v463 = vld [vmem:[%s5 + $0x10] sm:$0xf]
  %v464 = vld [vmem:[%s5 + $0x14] sm:$0xf]
  %v465 = vld [vmem:[%s5 + $0x18] sm:$0xf]
  %v466 = vld [vmem:[%s5 + $0x1c] sm:$0xf]
  %v467 = vld [vmem:[%s5 + $0x20] sm:$0xf]
  %v468 = vld [vmem:[%s5 + $0x24] sm:$0xf]
  %v469 = vld [vmem:[%s5 + $0x28] sm:$0xf]
  %v470 = vld [vmem:[%s5 + $0x2c] sm:$0xf]
  %v471 = vld [vmem:[%s5 + $0x30] sm:$0xf]
  %v472 = vld [vmem:[%s5 + $0x34] sm:$0xf]
  %v473 = vld [vmem:[%s5 + $0x38] sm:$0xf]
  %v474 = vld [vmem:[%s5 + $0x3c] sm:$0xf]
  %v475 = vld [vmem:[%s5 + $0x40] sm:$0xf]
  %v476 = vld [vmem:[%s5 + $0x44] sm:$0xf]
  %v477 = vld [vmem:[%s5 + $0x48] sm:$0xf]
  %v478 = vld [vmem:[%s5 + $0x4c] sm:$0xf]
  %v479 = vld [vmem:[%s5 + $0x50] sm:$0xf]
  %v480 = vld [vmem:[%s5 + $0x54] sm:$0xf]
  %v481 = vld [vmem:[%s5 + $0x58] sm:$0xf]
  %v482 = vld [vmem:[%s5 + $0x5c] sm:$0xf]
  %v483 = vld [vmem:[%s5 + $0x60] sm:$0xf]
  %v484 = vld [vmem:[%s5 + $0x64] sm:$0xf]
  %v485 = vld [vmem:[%s5 + $0x68] sm:$0xf]
  %v486 = vld [vmem:[%s5 + $0x6c] sm:$0xf]
  %v487 = vld [vmem:[%s5 + $0x70] sm:$0xf]
  %v488 = vld [vmem:[%s5 + $0x74] sm:$0xf]
  %v489 = vld [vmem:[%s5 + $0x78] sm:$0xf]
  %v490 = vld [vmem:[%s5 + $0x7c] sm:$0xf]
  %v491 = vld [vmem:[%s5 + $0x80] sm:$0xf]
  %v492 = vld [vmem:[%s5 + $0x84] sm:$0xf]
  %v493 = vld [vmem:[%s5 + $0x88] sm:$0xf]
  %v494 = vld [vmem:[%s5 + $0x8c] sm:$0xf]
  %v495 = vld [vmem:[%s5 + $0x90] sm:$0xf]
  %v496 = vld [vmem:[%s5 + $0x94] sm:$0xf]
  %v497 = vld [vmem:[%s5 + $0x98] sm:$0xf]
  %v498 = vld [vmem:[%s5 + $0x9c] sm:$0xf]
  %v499 = vld [vmem:[%s5 + $0xa0] sm:$0xf]
  %v500 = vld [vmem:[%s5 + $0xa4] sm:$0xf]
  %v501 = vld [vmem:[%s5 + $0xa8] sm:$0xf]
  %v502 = vld [vmem:[%s5 + $0xac] sm:$0xf]
  %v503 = vld [vmem:[%s5 + $0xb0] sm:$0xf]
  %v504 = vld [vmem:[%s5 + $0xb4] sm:$0xf]
  %v505 = vld [vmem:[%s5 + $0xb8] sm:$0xf]
  %v506 = vld [vmem:[%s5 + $0xbc] sm:$0xf]
  %v507 = vld [vmem:[%s5 + $0xc0] sm:$0xf]
  %v508 = vld [vmem:[%s5 + $0xc4] sm:$0xf]
  %v509 = vld [vmem:[%s5 + $0xc8] sm:$0xf]
  %v510 = vld [vmem:[%s5 + $0xcc] sm:$0xf]
  %v511 = vld [vmem:[%s5 + $0xd0] sm:$0xf]
  %v512 = vld [vmem:[%s5 + $0xd4] sm:$0xf]
  %v513 = vld [vmem:[%s5 + $0xd8] sm:$0xf]
  %v514 = vld [vmem:[%s5 + $0xdc] sm:$0xf]
  %v515 = vld [vmem:[%s5 + $0xe0] sm:$0xf]
  %v516 = vld [vmem:[%s5 + $0xe4] sm:$0xf]
  %v517 = vld [vmem:[%s5 + $0xe8] sm:$0xf]
  %v518 = vld [vmem:[%s5 + $0xec] sm:$0xf]
  %v519 = vld [vmem:[%s5 + $0xf0] sm:$0xf]
  %v520 = vld [vmem:[%s5 + $0xf4] sm:$0xf]
  %v521 = vld [vmem:[%s5 + $0xf8] sm:$0xf]
  %v522 = vld [vmem:[%s5 + $0xfc] sm:$0xf]
  %v587 = vunpack.c.l.b16 %v459
  %v588 = vunpack.c.l.b16 %v460
  %v589 = vunpack.c.l.b16 %v461
  %v590 = vunpack.c.l.b16 %v462
  %v591 = vunpack.c.l.b16 %v463
  %v592 = vunpack.c.l.b16 %v464
  %v593 = vunpack.c.l.b16 %v465
  %v594 = vunpack.c.l.b16 %v466
  %v595 = vunpack.c.l.b16 %v467
  %v596 = vunpack.c.l.b16 %v468
  %v597 = vunpack.c.l.b16 %v469
  %v598 = vunpack.c.l.b16 %v470
  %v599 = vunpack.c.l.b16 %v471
  %v600 = vunpack.c.l.b16 %v472
  %v601 = vunpack.c.l.b16 %v473
  %v602 = vunpack.c.l.b16 %v474
  %v603 = vunpack.c.l.b16 %v475
  %v604 = vunpack.c.l.b16 %v476
  %v605 = vunpack.c.l.b16 %v477
  %v606 = vunpack.c.l.b16 %v478
  %v607 = vunpack.c.l.b16 %v479
  %v608 = vunpack.c.l.b16 %v480
  %v609 = vunpack.c.l.b16 %v481
  %v610 = vunpack.c.l.b16 %v482
  %v611 = vunpack.c.l.b16 %v483
  %v612 = vunpack.c.l.b16 %v484
  %v613 = vunpack.c.l.b16 %v485
  %v614 = vunpack.c.l.b16 %v486
  %v615 = vunpack.c.l.b16 %v487
  %v616 = vunpack.c.l.b16 %v488
  %v617 = vunpack.c.l.b16 %v489
  %v618 = vunpack.c.l.b16 %v490
  %v619 = vunpack.c.l.b16 %v491
  %v620 = vunpack.c.l.b16 %v492
  %v621 = vunpack.c.l.b16 %v493
  %v622 = vunpack.c.l.b16 %v494
  %v623 = vunpack.c.l.b16 %v495
  %v624 = vunpack.c.l.b16 %v496
  %v625 = vunpack.c.l.b16 %v497
  %v626 = vunpack.c.l.b16 %v498
  %v627 = vunpack.c.l.b16 %v499
  %v628 = vunpack.c.l.b16 %v500
  %v629 = vunpack.c.l.b16 %v501
  %v630 = vunpack.c.l.b16 %v502
  %v631 = vunpack.c.l.b16 %v503
  %v632 = vunpack.c.l.b16 %v504
  %v633 = vunpack.c.l.b16 %v505
  %v634 = vunpack.c.l.b16 %v506
  %v635 = vunpack.c.l.b16 %v507
  %v636 = vunpack.c.l.b16 %v508
  %v637 = vunpack.c.l.b16 %v509
  %v638 = vunpack.c.l.b16 %v510
  %v639 = vunpack.c.l.b16 %v511
  %v640 = vunpack.c.l.b16 %v512
  %v641 = vunpack.c.l.b16 %v513
  %v642 = vunpack.c.l.b16 %v514
  %v643 = vunpack.c.l.b16 %v515
  %v644 = vunpack.c.l.b16 %v516
  %v645 = vunpack.c.l.b16 %v517
  %v646 = vunpack.c.l.b16 %v518
  %v647 = vunpack.c.l.b16 %v519
  %v648 = vunpack.c.l.b16 %v520
  %v649 = vunpack.c.l.b16 %v521
  %v650 = vunpack.c.l.b16 %v522
  %v651 = vpack.c.b16 %v588, %v587
  %v652 = vpack.c.b16 %v590, %v589
  %v653 = vpack.c.b16 %v592, %v591
  %v654 = vpack.c.b16 %v594, %v593
  %v655 = vpack.c.b16 %v596, %v595
  %v656 = vpack.c.b16 %v598, %v597
  %v657 = vpack.c.b16 %v600, %v599
  %v658 = vpack.c.b16 %v602, %v601
  %v659 = vpack.c.b16 %v604, %v603
  %v660 = vpack.c.b16 %v606, %v605
  %v661 = vpack.c.b16 %v608, %v607
  %v662 = vpack.c.b16 %v610, %v609
  %v663 = vpack.c.b16 %v612, %v611
  %v664 = vpack.c.b16 %v614, %v613
  %v665 = vpack.c.b16 %v616, %v615
  %v666 = vpack.c.b16 %v618, %v617
  %v667 = vpack.c.b16 %v620, %v619
  %v668 = vpack.c.b16 %v622, %v621
  %v669 = vpack.c.b16 %v624, %v623
  %v670 = vpack.c.b16 %v626, %v625
  %v671 = vpack.c.b16 %v628, %v627
  %v672 = vpack.c.b16 %v630, %v629
  %v673 = vpack.c.b16 %v632, %v631
  %v674 = vpack.c.b16 %v634, %v633
  %v675 = vpack.c.b16 %v636, %v635
  %v676 = vpack.c.b16 %v638, %v637
  %v677 = vpack.c.b16 %v640, %v639
  %v678 = vpack.c.b16 %v642, %v641
  %v679 = vpack.c.b16 %v644, %v643
  %v680 = vpack.c.b16 %v646, %v645
  %v681 = vpack.c.b16 %v648, %v647
  %v682 = vpack.c.b16 %v650, %v649
  %715 = vmatprep.subr.bf16.mxu0 0
  %716 = vmatpush1.bf16.msra.mxu0 %v651
  %717 = vmatprep.subr.bf16.mxu0 0
  %718 = vmatpush1.bf16.msra.mxu0 %v652
  %719 = vmatprep.subr.bf16.mxu0 0
  %720 = vmatpush1.bf16.msra.mxu0 %v653
  %721 = vmatprep.subr.bf16.mxu0 0
  %722 = vmatpush1.bf16.msra.mxu0 %v654
  %723 = vmatprep.subr.bf16.mxu0 0
  %724 = vmatpush1.bf16.msra.mxu0 %v655
  %725 = vmatprep.subr.bf16.mxu0 0
  %726 = vmatpush1.bf16.msra.mxu0 %v656
  %727 = vmatprep.subr.bf16.mxu0 0
  %728 = vmatpush1.bf16.msra.mxu0 %v657
  %729 = vmatprep.subr.bf16.mxu0 0
  %730 = vmatpush1.bf16.msra.mxu0 %v658
  %731 = vmatprep.subr.bf16.mxu0 0
  %732 = vmatpush1.bf16.msra.mxu0 %v659
  %733 = vmatprep.subr.bf16.mxu0 0
  %734 = vmatpush1.bf16.msra.mxu0 %v660
  %735 = vmatprep.subr.bf16.mxu0 0
  %736 = vmatpush1.bf16.msra.mxu0 %v661
  %737 = vmatprep.subr.bf16.mxu0 0
  %738 = vmatpush1.bf16.msra.mxu0 %v662
  %739 = vmatprep.subr.bf16.mxu0 0
  %740 = vmatpush1.bf16.msra.mxu0 %v663
  %741 = vmatprep.subr.bf16.mxu0 0
  %742 = vmatpush1.bf16.msra.mxu0 %v664
  %743 = vmatprep.subr.bf16.mxu0 0
  %744 = vmatpush1.bf16.msra.mxu0 %v665
  %745 = vmatprep.subr.bf16.mxu0 0
  %746 = vmatpush1.bf16.msra.mxu0 %v666
  %747 = vmatprep.mubr.bf16.mxu0 %v456
  %748 = vmatmul.mubr.bf16.gmra.mrb[0].mxu0 %v455
  %v749 = vpop.f32.mrb[0].mxu0
  %v750 = vadd.f32 0.0, %v749
  %v751 = vpop.f32.mrb[0].mxu0
  %v752 = vpop.f32.mrb[0].mxu0
  %v753 = vadd.f32 0.0, %v752
  %v754 = vpop.f32.mrb[0].mxu0
  %755 = vdwg.mxu0
  %756 = vmatprep.subr.bf16.mxu0 0
  %757 = vmatpush1.bf16.msra.mxu0 %v667
  %758 = vmatprep.subr.bf16.mxu0 0
  %759 = vmatpush1.bf16.msra.mxu0 %v668
  %760 = vmatprep.subr.bf16.mxu0 0
  %761 = vmatpush1.bf16.msra.mxu0 %v669
  %762 = vmatprep.subr.bf16.mxu0 0
  %763 = vmatpush1.bf16.msra.mxu0 %v670
  %764 = vmatprep.subr.bf16.mxu0 0
  %765 = vmatpush1.bf16.msra.mxu0 %v671
  %766 = vmatprep.subr.bf16.mxu0 0
  %767 = vmatpush1.bf16.msra.mxu0 %v672
  %768 = vmatprep.subr.bf16.mxu0 0
  %769 = vmatpush1.bf16.msra.mxu0 %v673
  %770 = vmatprep.subr.bf16.mxu0 0
  %771 = vmatpush1.bf16.msra.mxu0 %v674
  %772 = vmatprep.subr.bf16.mxu0 0
  %773 = vmatpush1.bf16.msra.mxu0 %v675
  %774 = vmatprep.subr.bf16.mxu0 0
  %775 = vmatpush1.bf16.msra.mxu0 %v676
  %776 = vmatprep.subr.bf16.mxu0 0
  %777 = vmatpush1.bf16.msra.mxu0 %v677
  %778 = vmatprep.subr.bf16.mxu0 0
  %779 = vmatpush1.bf16.msra.mxu0 %v678
  %780 = vmatprep.subr.bf16.mxu0 0
  %781 = vmatpush1.bf16.msra.mxu0 %v679
  %782 = vmatprep.subr.bf16.mxu0 0
  %783 = vmatpush1.bf16.msra.mxu0 %v680
  %784 = vmatprep.subr.bf16.mxu0 0
  %785 = vmatpush1.bf16.msra.mxu0 %v681
  %786 = vmatprep.subr.bf16.mxu0 0
  %787 = vmatpush1.bf16.msra.mxu0 %v682
  %788 = vmatprep.mubr.bf16.mxu0 %v458
  %789 = vmatmul.mubr.bf16.gmra.mrb[0].mxu0 %v457
  %v790 = vpop.f32.mrb[0].mxu0
  %v791 = vadd.f32 %v750, %v790
  %v792 = vpop.f32.mrb[0].mxu0
  %v793 = vpop.f32.mrb[0].mxu0
  %v794 = vadd.f32 %v753, %v793
  %v795 = vpop.f32.mrb[0].mxu0
  %796 = vdwg.mxu0
  %v797 = vadd.f32 %v453, %v791
  %v798 = vadd.f32 %v454, %v794
  %799 = vst [vmem:[#allocation3] sm:$0xff] %v797
  %800 = vst [vmem:[#allocation3 + $0x8] sm:$0xff] %v798
  // Predicated region
  $region34: #{generate_lm_forward.14} parent=0 // pred_check
    %p801 = pneg %p27
  $region35: #{generate_lm_forward.14} parent=0 // pred_check_branch
    %803 = sbr.rel (%p801) target = $region37
  $region36: #{generate_lm_forward.14} parent=0 // pred_region
    %v804 = vld [vmem:[#allocation3] sm:$0xff]
    %v805 = vld [vmem:[#allocation3 + $0x8] sm:$0xff]
    %v806 = vld [vmem:[%s6] sm:$0x1]
    %v808 = vlaneseq
    %v809 = vshrl.u32 %v808, 7
    %v810 = vsub.s32 0, %v809
    %v811 = vrot.slane %v806, %v810
    %v813 = vadd.f32 %v804, %v811
    %v814 = vadd.f32 %v805, %v811
    %v815 = vld [vmem:[%s0] sm:$0xf]
    %v816 = vld [vmem:[%s0 + $0x4] sm:$0xf]
    %v817 = vunpack.c.l.bf16 %v815
    %v818 = vunpack.c.l.bf16 %v816
    %v819 = vadd.f32 %v813, %v817
    %v820 = vadd.f32 %v814, %v818
    %v821 = vpack.c.bf16 %v820, %v819
    %v823 = vunpack.c.l.b16 %v821
    %v824 = vunpack.c.h.b16 %v821
    %v825 = vpack.c.b16 %v823, %v823
    %v826 = vpack.c.b16 %v824, %v824
    %829 = vst [vmem:[%s7] sm:$0xf] %v825
    %830 = vst [vmem:[%s7 + $0x4] sm:$0xf] %v826
  $region37: #{generate_lm_forward.14} parent=0 // pred_fallthru
    _
  // Predicated region
  $region38: #{generate_lm_forward.14} parent=0 // pred_check
    _
  $region39: #{generate_lm_forward.14} parent=0 // pred_check_branch
    %832 = sbr.rel (0) target = $region41
  $region40: #{generate_lm_forward.14} parent=0 // pred_region
    _
  $region41: #{generate_lm_forward.14} parent=0 // pred_fallthru
    _
  // Predicated region
  $region42: #{generate_lm_forward.14} parent=0 // pred_check
    _
  $region43: #{generate_lm_forward.14} parent=0 // pred_check_branch
    %834 = sbr.rel (0) target = $region45
  $region44: #{generate_lm_forward.14} parent=0 // pred_region
    _
  $region45: #{generate_lm_forward.14} parent=0 // pred_fallthru
    _

</llo_original>
